<compile_context>
chip_gen: v7x
topology: tpu7x:2x2x1
jax: 0.10.0
libtpu: 0.0.40
codegen_flags: <defaults>
</compile_context>

<pallas_src>
import functools

import numpy as np
import jax
import jax.numpy as jnp
from jax import lax
from jax.experimental import pallas as pl
from jax.experimental.pallas import tpu as pltpu


# bf16 operands + f32 accumulation for all projection / FFN matmuls
# (set to jnp.float32 to recover bit-exact f32 matmul semantics).
MATMUL_DTYPE = jnp.bfloat16
LN_EPS = 1e-5


# ----------------------------- Pallas kernel -------------------------------

def _layernorm(y, g, b):
    # Single-pass statistics: one reduction sweep for E[x] and E[x^2]
    # (var = E[x^2] - mu^2), halving XLU reduce passes vs. the two-pass form.
    mu = jnp.mean(y, axis=-1, keepdims=True)
    ms = jnp.mean(y * y, axis=-1, keepdims=True)
    var = ms - mu * mu
    return (y - mu) * lax.rsqrt(var + LN_EPS) * g + b


def _encoder_stack_kernel(emb_ref, pos_ref, wv_ref, bv_ref,
                          wqkv_ref, bqkv_ref, wo_ref, bo_ref,
                          ln1g_ref, ln1b_ref, w1_ref, b1_ref,
                          w2_ref, b2_ref, ln2g_ref, ln2b_ref,
                          o_ref, x_ref, *,
                          batch, seq, n_head, d_k, d_v, temperature):
    layer = pl.program_id(0)
    n = batch * seq

    # ---- layer-0 prologue: (src_emb + pos) @ W_vid2hid + b.  Result stays
    # resident in VMEM scratch for the whole stack (no HBM round-trips). -----
    @pl.when(layer == 0)
    def _():
        x0 = emb_ref[...] + pos_ref[...]
        x_ref[...] = (jnp.dot(x0.astype(MATMUL_DTYPE), wv_ref[...],
                              preferred_element_type=jnp.float32)
                      + bv_ref[...])

    x = x_ref[...]                                     # (n, d_model), f32

    # ---- fused Q|K|V projection: one MXU pass, bias in the epilogue --------
    qkv = (jnp.dot(x.astype(MATMUL_DTYPE), wqkv_ref[...],
                   preferred_element_type=jnp.float32) + bqkv_ref[...])

    k_off = n_head * d_k
    v_off = 2 * n_head * d_k
    inv_temp = 1.0 / temperature
    wo = wo_ref[...]                                   # (n_head*d_v, d_model)

    # ---- self-attention: 3-D dot_general batched over batch, heads as a
    # short static loop; the output projection is accumulated per head so the
    # concatenated-head tensor is never materialised (no attn scratch, no
    # masked sub-128-lane scratch stores).  Attention math stays f32 (tiny
    # fragments; avoids bf16 sub-tile packing).
    proj = jnp.zeros((n, wo.shape[1]), jnp.float32)
    for hi in range(n_head):
        q_h = qkv[:, hi * d_k:(hi + 1) * d_k].reshape(batch, seq, d_k)
        k_h = qkv[:, k_off + hi * d_k:
                     k_off + (hi + 1) * d_k].reshape(batch, seq, d_k)
        v_h = qkv[:, v_off + hi * d_v:
                     v_off + (hi + 1) * d_v].reshape(batch, seq, d_v)
        s = jnp.einsum('bqd,bkd->bqk', q_h, k_h,
                       preferred_element_type=jnp.float32) * inv_temp
        s = s - jnp.max(s, axis=-1, keepdims=True)
        p = jnp.exp(s)
        p = p * pl.reciprocal(jnp.sum(p, axis=-1, keepdims=True), approx=True)
        o_h = jnp.einsum('bqk,bkd->bqd', p, v_h,
                         preferred_element_type=jnp.float32)
        proj = proj + jnp.dot(o_h.reshape(n, d_v).astype(MATMUL_DTYPE),
                              wo[hi * d_v:(hi + 1) * d_v, :],
                              preferred_element_type=jnp.float32)

    # ---- output projection bias + add & LayerNorm 1 -------------------------
    x1 = _layernorm(proj + bo_ref[...] + x, ln1g_ref[...], ln1b_ref[...])

    # ---- position-wise FFN (Conv1d k=1 == per-position linear) + add & LN 2
    h = jnp.maximum(jnp.dot(x1.astype(MATMUL_DTYPE), w1_ref[...],
                            preferred_element_type=jnp.float32)
                    + b1_ref[...], 0.0)
    f = (jnp.dot(h.astype(MATMUL_DTYPE), w2_ref[...],
                 preferred_element_type=jnp.float32) + b2_ref[...])
    x2 = _layernorm(f + x1, ln2g_ref[...], ln2b_ref[...])

    x_ref[...] = x2                                    # stays resident in VMEM

    @pl.when(layer == pl.num_programs(0) - 1)
    def _():
        o_ref[...] = x2                                # single HBM writeback


# ----------------------------- Pallas wrapper --------------------------------

def _const_spec(shape):
    nd = len(shape)
    return pl.BlockSpec(tuple(shape), lambda l, _nd=nd: (0,) * _nd)


def _layer_spec(shape):
    nd = len(shape)
    return pl.BlockSpec((None,) + tuple(shape),
                        lambda l, _nd=nd: (l,) + (0,) * _nd)


def pallas_encoder_stack(emb2d, pos2d, params, *, batch, seq, n_head, d_k, d_v):
    """Whole encoder forward (vid2hid + all layers) as ONE pallas_call."""
    n, d_vid = emb2d.shape
    d_model = params["vid2hid_w"].shape[1]
    n_layers, _, d_qkv = params["wqkv"].shape
    d_inner = params["w1"].shape[2]
    temperature = float(np.power(d_k, 0.5))

    kern = functools.partial(_encoder_stack_kernel, batch=batch, seq=seq,
                             n_head=n_head, d_k=d_k, d_v=d_v,
                             temperature=temperature)

    # Grid axis = layer index ("arbitrary": layers are sequential).  Per-layer
    # weights are indexed by the layer id so BlockSpec double-buffers the next
    # layer's weights behind the current layer's compute; constant-index
    # inputs (emb/pos/vid2hid) are DMA'd once.
    # TODO(synk): for realistic shapes, add a "parallel" row-tile grid axis
    # (>=512-row, lane-dense >=128-wide feature tiles) and set
    # vmem_limit_bytes for v7x's 64 MiB VMEM.
    return pl.pallas_call(
        kern,
        grid=(n_layers,),
        in_specs=[_const_spec((n, d_vid)), _const_spec((n, d_vid)),
                  _const_spec((d_vid, d_model)), _const_spec((1, d_model)),
                  _layer_spec((d_model, d_qkv)), _layer_spec((1, d_qkv)),
                  _layer_spec((n_head * d_v, d_model)),
                  _layer_spec((1, d_model)),
                  _layer_spec((1, d_model)), _layer_spec((1, d_model)),
                  _layer_spec((d_model, d_inner)), _layer_spec((1, d_inner)),
                  _layer_spec((d_inner, d_model)), _layer_spec((1, d_model)),
                  _layer_spec((1, d_model)), _layer_spec((1, d_model))],
        out_specs=_const_spec((n, d_model)),
        out_shape=jax.ShapeDtypeStruct((n, d_model), jnp.float32),
        scratch_shapes=[pltpu.VMEM((n, d_model), jnp.float32)],
        compiler_params=pltpu.CompilerParams(
            dimension_semantics=("arbitrary",)),
    )(emb2d, pos2d,
      params["vid2hid_w"], params["vid2hid_b"],
      params["wqkv"], params["bqkv"], params["wo"], params["bo"],
      params["ln1_g"], params["ln1_b"], params["w1"], params["b1"],
      params["w2"], params["b2"], params["ln2_g"], params["ln2_b"])


# -------------------------- model setup / forward ----------------------------

def get_sinusoid_encoding_table(n_position, d_hid, padding_idx=None):
    """Same numerical recipe as the PyTorch reference."""
    def cal_angle(position, hid_idx):
        return position / np.power(10000, 2 * (hid_idx // 2) / d_hid)

    def get_posi_angle_vec(position):
        return [cal_angle(position, hid_j) for hid_j in range(d_hid)]

    table = np.array([get_posi_angle_vec(p) for p in range(n_position)])
    table[:, 0::2] = np.sin(table[:, 0::2])
    table[:, 1::2] = np.cos(table[:, 1::2])
    if padding_idx is not None:
        table[padding_idx] = 0.0
    return jnp.asarray(table, dtype=jnp.float32)


def _init_linear(key, d_in, d_out, scale=0.05):
    kw, kb = jax.random.split(key)
    w = jax.random.normal(kw, (d_in, d_out), jnp.float32) * scale
    b = jax.random.normal(kb, (1, d_out), jnp.float32) * scale
    return w, b


def init_encoder_params(key, n_frames, d_video_vec, n_layers, n_head,
                        d_k, d_v, d_model, d_inner):
    n_position = n_frames + 1
    params = {
        "pos_table": get_sinusoid_encoding_table(n_position, d_video_vec,
                                                 padding_idx=0),
        "n_head": n_head, "d_k": d_k, "d_v": d_v, "d_model": d_model,
    }
    key, k0 = jax.random.split(key)
    wv, bv = _init_linear(k0, d_video_vec, d_model)
    # Matmul weights are pre-cast ONCE to MATMUL_DTYPE (bf16): halves the
    # weight HBM->VMEM DMA per layer and removes per-call casts in-kernel.
    params["vid2hid_w"] = wv.astype(MATMUL_DTYPE)
    params["vid2hid_b"] = bv

    keys = ("wqkv", "bqkv", "wo", "bo", "w1", "b1", "w2", "b2",
            "ln1_g", "ln1_b", "ln2_g", "ln2_b")
    per_layer = {k: [] for k in keys}
    for _ in range(n_layers):
        key, kq, kk, kv, ko, k1, k2 = jax.random.split(key, 7)
        wq, bq = _init_linear(kq, d_model, n_head * d_k)
        wk, bk = _init_linear(kk, d_model, n_head * d_k)
        wvv, bvv = _init_linear(kv, d_model, n_head * d_v)
        # Fused Q|K|V projection weight: one MXU pass instead of three.
        per_layer["wqkv"].append(jnp.concatenate([wq, wk, wvv], axis=1))
        per_layer["bqkv"].append(jnp.concatenate([bq, bk, bvv], axis=1))
        wo, bo = _init_linear(ko, n_head * d_v, d_model)
        per_layer["wo"].append(wo)
        per_layer["bo"].append(bo)
        # Conv1d(kernel=1) weights of PositionwiseFeedForward, stored as
        # (d_in, d_out) matmul weights.
        w1, b1 = _init_linear(k1, d_model, d_inner)
        w2, b2 = _init_linear(k2, d_inner, d_model)
        per_layer["w1"].append(w1)
        per_layer["b1"].append(b1)
        per_layer["w2"].append(w2)
        per_layer["b2"].append(b2)
        per_layer["ln1_g"].append(jnp.ones((1, d_model), jnp.float32))
        per_layer["ln1_b"].append(jnp.zeros((1, d_model), jnp.float32))
        per_layer["ln2_g"].append(jnp.ones((1, d_model), jnp.float32))
        per_layer["ln2_b"].append(jnp.zeros((1, d_model), jnp.float32))

    matmul_keys = ("wqkv", "wo", "w1", "w2")
    for k, vals in per_layer.items():
        stacked = jnp.stack(vals, axis=0)          # leading layer dim
        params[k] = stacked.astype(MATMUL_DTYPE) if k in matmul_keys else stacked
    return params


def encoder_forward(src_emb, src_pos, params):
    b, s, d_vid = src_emb.shape
    d_model = params["d_model"]
    # Positional lookup of the tiny frozen sinusoid table (XLA gather glue).
    # TODO(synk): at scale, prefetch src_pos (PrefetchScalarGridSpec) and
    # gather the table inside the kernel to halve the vid2hid input DMA.
    pos_emb = params["pos_table"][src_pos]
    # input_dropout / attention / FFN dropouts: identity in eval mode.
    x = pallas_encoder_stack(src_emb.reshape(b * s, d_vid),
                             pos_emb.reshape(b * s, d_vid),
                             params, batch=b, seq=s,
                             n_head=params["n_head"],
                             d_k=params["d_k"], d_v=params["d_v"])
    # TODO(synk): return_attns=True path (per-layer attention probabilities)
    # is not materialized; the fused kernel drops them as they never leave
    # vregs.
    return (x.reshape(b, s, d_model),)


# --------------------------------- main ---------------------------------------

if __name__ == "__main__":
    # small, module-consistent hyper-parameters
    n_frames = 8
    d_video_vec = 32
    n_layers = 2
    n_head = 2
    d_k = 8
    d_v = 8
    d_model = 32
    d_inner = 64
    batch = 2
    seq = n_frames

    key = jax.random.PRNGKey(0)
    key, k_param, k_emb = jax.random.split(key, 3)

    params = init_encoder_params(k_param, n_frames, d_video_vec, n_layers,
                                 n_head, d_k, d_v, d_model, d_inner)

    src_emb = jax.random.normal(k_emb, (batch, seq, d_video_vec), jnp.float32)
    # frame positions 1..seq (0 is the padding index of the sinusoid table)
    src_pos = jnp.tile(jnp.arange(1, seq + 1, dtype=jnp.int32)[None, :],
                       (batch, 1))

    fwd = jax.jit(lambda emb, pos: encoder_forward(emb, pos, params))
    (enc_output,) = fwd(src_emb, src_pos)
    jax.block_until_ready(enc_output)

    assert enc_output.shape == (batch, seq, d_model)
    assert bool(jnp.all(jnp.isfinite(enc_output)))
    print("KERNEL_OK")
</pallas_src>

<mosaic_0001>
module attributes {stable_mosaic.version = 11 : i64} {
  func.func @_encoder_stack_kernel(%arg0: i32, %arg1: memref<16x32xf32, #tpu.memory_space<vmem>>, %arg2: memref<16x32xf32, #tpu.memory_space<vmem>>, %arg3: memref<32x32xbf16, #tpu.memory_space<vmem>>, %arg4: memref<1x32xf32, #tpu.memory_space<vmem>>, %arg5: memref<1x32x48xbf16, #tpu.memory_space<vmem>>, %arg6: memref<1x1x48xf32, #tpu.memory_space<vmem>>, %arg7: memref<1x16x32xbf16, #tpu.memory_space<vmem>>, %arg8: memref<1x1x32xf32, #tpu.memory_space<vmem>>, %arg9: memref<1x1x32xf32, #tpu.memory_space<vmem>>, %arg10: memref<1x1x32xf32, #tpu.memory_space<vmem>>, %arg11: memref<1x32x64xbf16, #tpu.memory_space<vmem>>, %arg12: memref<1x1x64xf32, #tpu.memory_space<vmem>>, %arg13: memref<1x64x32xbf16, #tpu.memory_space<vmem>>, %arg14: memref<1x1x32xf32, #tpu.memory_space<vmem>>, %arg15: memref<1x1x32xf32, #tpu.memory_space<vmem>>, %arg16: memref<1x1x32xf32, #tpu.memory_space<vmem>>, %arg17: memref<16x32xf32, #tpu.memory_space<vmem>>, %arg18: memref<16x32xf32, #tpu.memory_space<vmem>>) attributes {dimension_semantics = [#tpu.dimension_semantics<arbitrary>], iteration_bounds = array<i64: 2>, scalar_prefetch = 0 : i64, scratch_operands = 1 : i64, tpu.core_type = #tpu.core_type<tc>, window_params = [{pipeline_mode = #tpu.pipeline_mode<synchronous>, transform_indices = @transform_0, window_bounds = array<i64: 16, 32>}, {pipeline_mode = #tpu.pipeline_mode<synchronous>, transform_indices = @transform_1, window_bounds = array<i64: 16, 32>}, {pipeline_mode = #tpu.pipeline_mode<synchronous>, transform_indices = @transform_2, window_bounds = array<i64: 32, 32>}, {pipeline_mode = #tpu.pipeline_mode<synchronous>, transform_indices = @transform_3, window_bounds = array<i64: 1, 32>}, {transform_indices = @transform_4, window_bounds = array<i64: 1, 32, 48>}, {transform_indices = @transform_5, window_bounds = array<i64: 1, 1, 48>}, {transform_indices = @transform_6, window_bounds = array<i64: 1, 16, 32>}, {transform_indices = @transform_7, window_bounds = array<i64: 1, 1, 32>}, {transform_indices = @transform_8, window_bounds = array<i64: 1, 1, 32>}, {transform_indices = @transform_9, window_bounds = array<i64: 1, 1, 32>}, {transform_indices = @transform_10, window_bounds = array<i64: 1, 32, 64>}, {transform_indices = @transform_11, window_bounds = array<i64: 1, 1, 64>}, {transform_indices = @transform_12, window_bounds = array<i64: 1, 64, 32>}, {transform_indices = @transform_13, window_bounds = array<i64: 1, 1, 32>}, {transform_indices = @transform_14, window_bounds = array<i64: 1, 1, 32>}, {transform_indices = @transform_15, window_bounds = array<i64: 1, 1, 32>}, {pipeline_mode = #tpu.pipeline_mode<synchronous>, transform_indices = @transform_16, window_bounds = array<i64: 16, 32>}]} {
    %c0_i32 = arith.constant 0 : i32
    %0 = arith.cmpi eq, %arg0, %c0_i32 : i32
    %1 = arith.extui %0 : i1 to i32
    %c0_i32_0 = arith.constant 0 : i32
    %2 = arith.cmpi ne, %1, %c0_i32_0 : i32
    scf.if %2 {
      %c0_67 = arith.constant 0 : index
      %c0_68 = arith.constant 0 : index
      %145 = vector.load %arg1[%c0_67, %c0_68] : memref<16x32xf32, #tpu.memory_space<vmem>>, vector<16x32xf32>
      %c0_69 = arith.constant 0 : index
      %c0_70 = arith.constant 0 : index
      %146 = vector.load %arg2[%c0_69, %c0_70] : memref<16x32xf32, #tpu.memory_space<vmem>>, vector<16x32xf32>
      %147 = arith.addf %145, %146 : vector<16x32xf32>
      %148 = arith.truncf %147 : vector<16x32xf32> to vector<16x32xbf16>
      %c0_71 = arith.constant 0 : index
      %c0_72 = arith.constant 0 : index
      %149 = vector.load %arg3[%c0_71, %c0_72] : memref<32x32xbf16, #tpu.memory_space<vmem>>, vector<32x32xbf16>
      %cst_73 = arith.constant dense<0.000000e+00> : vector<16x32xf32>
      %150 = tpu.matmul %148, %149, %cst_73 {dimension_numbers = #tpu.dot_dimension_numbers<[1], [0], [0], [1], [0, 0, 1, 1], [], []>} : vector<16x32xbf16>, vector<32x32xbf16>, vector<16x32xf32> -> vector<16x32xf32>
      %c0_74 = arith.constant 0 : index
      %c0_75 = arith.constant 0 : index
      %151 = vector.load %arg4[%c0_74, %c0_75] : memref<1x32xf32, #tpu.memory_space<vmem>>, vector<1x32xf32>
      %152 = vector.broadcast %151 : vector<1x32xf32> to vector<16x32xf32>
      %153 = arith.addf %150, %152 : vector<16x32xf32>
      %c0_76 = arith.constant 0 : index
      %c0_77 = arith.constant 0 : index
      %154 = vector.load %arg18[%c0_76, %c0_77] : memref<16x32xf32, #tpu.memory_space<vmem>>, vector<16x32xf32>
      tpu.vector_store %arg18[%c0_76, %c0_77], %153 {strides = array<i32>} : memref<16x32xf32, #tpu.memory_space<vmem>>, vector<16x32xf32>,
    } else {
    }
    %c0 = arith.constant 0 : index
    %c0_1 = arith.constant 0 : index
    %3 = vector.load %arg18[%c0, %c0_1] : memref<16x32xf32, #tpu.memory_space<vmem>>, vector<16x32xf32>
    %4 = arith.truncf %3 : vector<16x32xf32> to vector<16x32xbf16>
    %c0_2 = arith.constant 0 : index
    %c0_3 = arith.constant 0 : index
    %c0_4 = arith.constant 0 : index
    %5 = vector.load %arg5[%c0_2, %c0_3, %c0_4] : memref<1x32x48xbf16, #tpu.memory_space<vmem>>, vector<1x32x48xbf16>
    %6 = vector.shape_cast %5 : vector<1x32x48xbf16> to vector<32x48xbf16>
    %cst = arith.constant dense<0.000000e+00> : vector<16x48xf32>
    %7 = tpu.matmul %4, %6, %cst {dimension_numbers = #tpu.dot_dimension_numbers<[1], [0], [0], [1], [0, 0, 1, 1], [], []>} : vector<16x32xbf16>, vector<32x48xbf16>, vector<16x48xf32> -> vector<16x48xf32>
    %c0_5 = arith.constant 0 : index
    %c0_6 = arith.constant 0 : index
    %c0_7 = arith.constant 0 : index
    %8 = vector.load %arg6[%c0_5, %c0_6, %c0_7] : memref<1x1x48xf32, #tpu.memory_space<vmem>>, vector<1x1x48xf32>
    %9 = vector.shape_cast %8 : vector<1x1x48xf32> to vector<1x48xf32>
    %10 = vector.broadcast %9 : vector<1x48xf32> to vector<16x48xf32>
    %11 = arith.addf %7, %10 : vector<16x48xf32>
    %c0_8 = arith.constant 0 : index
    %c0_9 = arith.constant 0 : index
    %c0_10 = arith.constant 0 : index
    %12 = vector.load %arg7[%c0_8, %c0_9, %c0_10] : memref<1x16x32xbf16, #tpu.memory_space<vmem>>, vector<1x16x32xbf16>
    %13 = vector.shape_cast %12 : vector<1x16x32xbf16> to vector<16x32xbf16>
    %cst_11 = arith.constant 0.000000e+00 : f32
    %14 = vector.broadcast %cst_11 : f32 to vector<16x32xf32>
    %15 = vector.extract_strided_slice %11 {offsets = [0, 0], sizes = [16, 8], strides = [1, 1]} : vector<16x48xf32> to vector<16x8xf32>
    %16 = vector.shape_cast %15 : vector<16x8xf32> to vector<2x8x8xf32>
    %17 = vector.extract_strided_slice %11 {offsets = [0, 16], sizes = [16, 8], strides = [1, 1]} : vector<16x48xf32> to vector<16x8xf32>
    %18 = vector.shape_cast %17 : vector<16x8xf32> to vector<2x8x8xf32>
    %19 = vector.extract_strided_slice %11 {offsets = [0, 32], sizes = [16, 8], strides = [1, 1]} : vector<16x48xf32> to vector<16x8xf32>
    %20 = vector.shape_cast %19 : vector<16x8xf32> to vector<2x8x8xf32>
    "tpu.trace_start"() <{level = 10 : i32, message = "bqd,bkd->bqk"}> : () -> ()
    %cst_12 = arith.constant dense<0.000000e+00> : vector<2x8x8xf32>
    %21 = tpu.matmul %16, %18, %cst_12 {dimension_numbers = #tpu.dot_dimension_numbers<[2], [2], [1], [1], [0, 0, 0, 1, 1, 1], [0], [0]>} : vector<2x8x8xf32>, vector<2x8x8xf32>, vector<2x8x8xf32> -> vector<2x8x8xf32>
    "tpu.trace_stop"() : () -> ()
    %cst_13 = arith.constant 0.353553385 : f32
    %22 = vector.broadcast %cst_13 : f32 to vector<2x8x8xf32>
    %23 = arith.mulf %21, %22 : vector<2x8x8xf32>
    %cst_14 = arith.constant dense<0xFF800000> : vector<2x8xf32>
    %24 = vector.multi_reduction <maximumf>, %23, %cst_14 [2] : vector<2x8x8xf32> to vector<2x8xf32>
    %25 = vector.shape_cast %24 : vector<2x8xf32> to vector<2x8x1xf32>
    %26 = vector.broadcast %25 : vector<2x8x1xf32> to vector<2x8x8xf32>
    %27 = arith.subf %23, %26 : vector<2x8x8xf32>
    %28 = math.exp %27 : vector<2x8x8xf32>
    %cst_15 = arith.constant dense<0.000000e+00> : vector<2x8xf32>
    %29 = vector.multi_reduction <add>, %28, %cst_15 [2] : vector<2x8x8xf32> to vector<2x8xf32>
    %30 = vector.shape_cast %29 : vector<2x8xf32> to vector<2x8x1xf32>
    %31 = tpu.reciprocal %30 {approx = true} : vector<2x8x1xf32> -> vector<2x8x1xf32>
    %32 = vector.broadcast %31 : vector<2x8x1xf32> to vector<2x8x8xf32>
    %33 = arith.mulf %28, %32 : vector<2x8x8xf32>
    "tpu.trace_start"() <{level = 10 : i32, message = "bqk,bkd->bqd"}> : () -> ()
    %cst_16 = arith.constant dense<0.000000e+00> : vector<2x8x8xf32>
    %34 = tpu.matmul %33, %20, %cst_16 {dimension_numbers = #tpu.dot_dimension_numbers<[2], [1], [1], [2], [0, 0, 0, 1, 1, 2], [0], [0]>} : vector<2x8x8xf32>, vector<2x8x8xf32>, vector<2x8x8xf32> -> vector<2x8x8xf32>
    "tpu.trace_stop"() : () -> ()
    %35 = vector.shape_cast %34 : vector<2x8x8xf32> to vector<16x8xf32>
    %36 = arith.truncf %35 : vector<16x8xf32> to vector<16x8xbf16>
    %37 = vector.extract_strided_slice %13 {offsets = [0, 0], sizes = [8, 32], strides = [1, 1]} : vector<16x32xbf16> to vector<8x32xbf16>
    %cst_17 = arith.constant dense<0.000000e+00> : vector<16x32xf32>
    %38 = tpu.matmul %36, %37, %cst_17 {dimension_numbers = #tpu.dot_dimension_numbers<[1], [0], [0], [1], [0, 0, 1, 1], [], []>} : vector<16x8xbf16>, vector<8x32xbf16>, vector<16x32xf32> -> vector<16x32xf32>
    %39 = arith.addf %14, %38 : vector<16x32xf32>
    %40 = vector.extract_strided_slice %11 {offsets = [0, 8], sizes = [16, 8], strides = [1, 1]} : vector<16x48xf32> to vector<16x8xf32>
    %41 = vector.shape_cast %40 : vector<16x8xf32> to vector<2x8x8xf32>
    %42 = vector.extract_strided_slice %11 {offsets = [0, 24], sizes = [16, 8], strides = [1, 1]} : vector<16x48xf32> to vector<16x8xf32>
    %43 = vector.shape_cast %42 : vector<16x8xf32> to vector<2x8x8xf32>
    %44 = vector.extract_strided_slice %11 {offsets = [0, 40], sizes = [16, 8], strides = [1, 1]} : vector<16x48xf32> to vector<16x8xf32>
    %45 = vector.shape_cast %44 : vector<16x8xf32> to vector<2x8x8xf32>
    "tpu.trace_start"() <{level = 10 : i32, message = "bqd,bkd->bqk"}> : () -> ()
    %cst_18 = arith.constant dense<0.000000e+00> : vector<2x8x8xf32>
    %46 = tpu.matmul %41, %43, %cst_18 {dimension_numbers = #tpu.dot_dimension_numbers<[2], [2], [1], [1], [0, 0, 0, 1, 1, 1], [0], [0]>} : vector<2x8x8xf32>, vector<2x8x8xf32>, vector<2x8x8xf32> -> vector<2x8x8xf32>
    "tpu.trace_stop"() : () -> ()
    %cst_19 = arith.constant 0.353553385 : f32
    %47 = vector.broadcast %cst_19 : f32 to vector<2x8x8xf32>
    %48 = arith.mulf %46, %47 : vector<2x8x8xf32>
    %cst_20 = arith.constant dense<0xFF800000> : vector<2x8xf32>
    %49 = vector.multi_reduction <maximumf>, %48, %cst_20 [2] : vector<2x8x8xf32> to vector<2x8xf32>
    %50 = vector.shape_cast %49 : vector<2x8xf32> to vector<2x8x1xf32>
    %51 = vector.broadcast %50 : vector<2x8x1xf32> to vector<2x8x8xf32>
    %52 = arith.subf %48, %51 : vector<2x8x8xf32>
    %53 = math.exp %52 : vector<2x8x8xf32>
    %cst_21 = arith.constant dense<0.000000e+00> : vector<2x8xf32>
    %54 = vector.multi_reduction <add>, %53, %cst_21 [2] : vector<2x8x8xf32> to vector<2x8xf32>
    %55 = vector.shape_cast %54 : vector<2x8xf32> to vector<2x8x1xf32>
    %56 = tpu.reciprocal %55 {approx = true} : vector<2x8x1xf32> -> vector<2x8x1xf32>
    %57 = vector.broadcast %56 : vector<2x8x1xf32> to vector<2x8x8xf32>
    %58 = arith.mulf %53, %57 : vector<2x8x8xf32>
    "tpu.trace_start"() <{level = 10 : i32, message = "bqk,bkd->bqd"}> : () -> ()
    %cst_22 = arith.constant dense<0.000000e+00> : vector<2x8x8xf32>
    %59 = tpu.matmul %58, %45, %cst_22 {dimension_numbers = #tpu.dot_dimension_numbers<[2], [1], [1], [2], [0, 0, 0, 1, 1, 2], [0], [0]>} : vector<2x8x8xf32>, vector<2x8x8xf32>, vector<2x8x8xf32> -> vector<2x8x8xf32>
    "tpu.trace_stop"() : () -> ()
    %60 = vector.shape_cast %59 : vector<2x8x8xf32> to vector<16x8xf32>
    %61 = arith.truncf %60 : vector<16x8xf32> to vector<16x8xbf16>
    %62 = vector.extract_strided_slice %13 {offsets = [8, 0], sizes = [8, 32], strides = [1, 1]} : vector<16x32xbf16> to vector<8x32xbf16>
    %cst_23 = arith.constant dense<0.000000e+00> : vector<16x32xf32>
    %63 = tpu.matmul %61, %62, %cst_23 {dimension_numbers = #tpu.dot_dimension_numbers<[1], [0], [0], [1], [0, 0, 1, 1], [], []>} : vector<16x8xbf16>, vector<8x32xbf16>, vector<16x32xf32> -> vector<16x32xf32>
    %64 = arith.addf %39, %63 : vector<16x32xf32>
    %c0_24 = arith.constant 0 : index
    %c0_25 = arith.constant 0 : index
    %c0_26 = arith.constant 0 : index
    %65 = vector.load %arg8[%c0_24, %c0_25, %c0_26] : memref<1x1x32xf32, #tpu.memory_space<vmem>>, vector<1x1x32xf32>
    %66 = vector.shape_cast %65 : vector<1x1x32xf32> to vector<1x32xf32>
    %67 = vector.broadcast %66 : vector<1x32xf32> to vector<16x32xf32>
    %68 = arith.addf %64, %67 : vector<16x32xf32>
    %69 = arith.addf %68, %3 : vector<16x32xf32>
    %c0_27 = arith.constant 0 : index
    %c0_28 = arith.constant 0 : index
    %c0_29 = arith.constant 0 : index
    %70 = vector.load %arg9[%c0_27, %c0_28, %c0_29] : memref<1x1x32xf32, #tpu.memory_space<vmem>>, vector<1x1x32xf32>
    %71 = vector.shape_cast %70 : vector<1x1x32xf32> to vector<1x32xf32>
    %c0_30 = arith.constant 0 : index
    %c0_31 = arith.constant 0 : index
    %c0_32 = arith.constant 0 : index
    %72 = vector.load %arg10[%c0_30, %c0_31, %c0_32] : memref<1x1x32xf32, #tpu.memory_space<vmem>>, vector<1x1x32xf32>
    %73 = vector.shape_cast %72 : vector<1x1x32xf32> to vector<1x32xf32>
    %cst_33 = arith.constant dense<0.000000e+00> : vector<16xf32>
    %74 = vector.multi_reduction <add>, %69, %cst_33 [1] : vector<16x32xf32> to vector<16xf32>
    %75 = vector.shape_cast %74 : vector<16xf32> to vector<16x1xf32>
    %cst_34 = arith.constant 3.200000e+01 : f32
    %76 = vector.broadcast %cst_34 : f32 to vector<16x1xf32>
    %77 = arith.divf %75, %76 : vector<16x1xf32>
    %78 = arith.mulf %69, %69 : vector<16x32xf32>
    %cst_35 = arith.constant dense<0.000000e+00> : vector<16xf32>
    %79 = vector.multi_reduction <add>, %78, %cst_35 [1] : vector<16x32xf32> to vector<16xf32>
    %80 = vector.shape_cast %79 : vector<16xf32> to vector<16x1xf32>
    %cst_36 = arith.constant 3.200000e+01 : f32
    %81 = vector.broadcast %cst_36 : f32 to vector<16x1xf32>
    %82 = arith.divf %80, %81 : vector<16x1xf32>
    %83 = arith.mulf %77, %77 : vector<16x1xf32>
    %84 = arith.subf %82, %83 : vector<16x1xf32>
    %85 = vector.broadcast %77 : vector<16x1xf32> to vector<16x32xf32>
    %86 = arith.subf %69, %85 : vector<16x32xf32>
    %cst_37 = arith.constant 9.99999974E-6 : f32
    %87 = vector.broadcast %cst_37 : f32 to vector<16x1xf32>
    %88 = arith.addf %84, %87 : vector<16x1xf32>
    %89 = math.rsqrt %88 : vector<16x1xf32>
    %90 = vector.broadcast %89 : vector<16x1xf32> to vector<16x32xf32>
    %91 = arith.mulf %86, %90 : vector<16x32xf32>
    %92 = vector.broadcast %71 : vector<1x32xf32> to vector<16x32xf32>
    %93 = arith.mulf %91, %92 : vector<16x32xf32>
    %94 = vector.broadcast %73 : vector<1x32xf32> to vector<16x32xf32>
    %95 = arith.addf %93, %94 : vector<16x32xf32>
    %96 = arith.truncf %95 : vector<16x32xf32> to vector<16x32xbf16>
    %c0_38 = arith.constant 0 : index
    %c0_39 = arith.constant 0 : index
    %c0_40 = arith.constant 0 : index
    %97 = vector.load %arg11[%c0_38, %c0_39, %c0_40] : memref<1x32x64xbf16, #tpu.memory_space<vmem>>, vector<1x32x64xbf16>
    %98 = vector.shape_cast %97 : vector<1x32x64xbf16> to vector<32x64xbf16>
    %cst_41 = arith.constant dense<0.000000e+00> : vector<16x64xf32>
    %99 = tpu.matmul %96, %98, %cst_41 {dimension_numbers = #tpu.dot_dimension_numbers<[1], [0], [0], [1], [0, 0, 1, 1], [], []>} : vector<16x32xbf16>, vector<32x64xbf16>, vector<16x64xf32> -> vector<16x64xf32>
    %c0_42 = arith.constant 0 : index
    %c0_43 = arith.constant 0 : index
    %c0_44 = arith.constant 0 : index
    %100 = vector.load %arg12[%c0_42, %c0_43, %c0_44] : memref<1x1x64xf32, #tpu.memory_space<vmem>>, vector<1x1x64xf32>
    %101 = vector.shape_cast %100 : vector<1x1x64xf32> to vector<1x64xf32>
    %102 = vector.broadcast %101 : vector<1x64xf32> to vector<16x64xf32>
    %103 = arith.addf %99, %102 : vector<16x64xf32>
    %cst_45 = arith.constant 0.000000e+00 : f32
    %104 = vector.broadcast %cst_45 : f32 to vector<16x64xf32>
    %105 = arith.maximumf %103, %104 : vector<16x64xf32>
    %106 = arith.truncf %105 : vector<16x64xf32> to vector<16x64xbf16>
    %c0_46 = arith.constant 0 : index
    %c0_47 = arith.constant 0 : index
    %c0_48 = arith.constant 0 : index
    %107 = vector.load %arg13[%c0_46, %c0_47, %c0_48] : memref<1x64x32xbf16, #tpu.memory_space<vmem>>, vector<1x64x32xbf16>
    %108 = vector.shape_cast %107 : vector<1x64x32xbf16> to vector<64x32xbf16>
    %cst_49 = arith.constant dense<0.000000e+00> : vector<16x32xf32>
    %109 = tpu.matmul %106, %108, %cst_49 {dimension_numbers = #tpu.dot_dimension_numbers<[1], [0], [0], [1], [0, 0, 1, 1], [], []>} : vector<16x64xbf16>, vector<64x32xbf16>, vector<16x32xf32> -> vector<16x32xf32>
    %c0_50 = arith.constant 0 : index
    %c0_51 = arith.constant 0 : index
    %c0_52 = arith.constant 0 : index
    %110 = vector.load %arg14[%c0_50, %c0_51, %c0_52] : memref<1x1x32xf32, #tpu.memory_space<vmem>>, vector<1x1x32xf32>
    %111 = vector.shape_cast %110 : vector<1x1x32xf32> to vector<1x32xf32>
    %112 = vector.broadcast %111 : vector<1x32xf32> to vector<16x32xf32>
    %113 = arith.addf %109, %112 : vector<16x32xf32>
    %114 = arith.addf %113, %95 : vector<16x32xf32>
    %c0_53 = arith.constant 0 : index
    %c0_54 = arith.constant 0 : index
    %c0_55 = arith.constant 0 : index
    %115 = vector.load %arg15[%c0_53, %c0_54, %c0_55] : memref<1x1x32xf32, #tpu.memory_space<vmem>>, vector<1x1x32xf32>
    %116 = vector.shape_cast %115 : vector<1x1x32xf32> to vector<1x32xf32>
    %c0_56 = arith.constant 0 : index
    %c0_57 = arith.constant 0 : index
    %c0_58 = arith.constant 0 : index
    %117 = vector.load %arg16[%c0_56, %c0_57, %c0_58] : memref<1x1x32xf32, #tpu.memory_space<vmem>>, vector<1x1x32xf32>
    %118 = vector.shape_cast %117 : vector<1x1x32xf32> to vector<1x32xf32>
    %cst_59 = arith.constant dense<0.000000e+00> : vector<16xf32>
    %119 = vector.multi_reduction <add>, %114, %cst_59 [1] : vector<16x32xf32> to vector<16xf32>
    %120 = vector.shape_cast %119 : vector<16xf32> to vector<16x1xf32>
    %cst_60 = arith.constant 3.200000e+01 : f32
    %121 = vector.broadcast %cst_60 : f32 to vector<16x1xf32>
    %122 = arith.divf %120, %121 : vector<16x1xf32>
    %123 = arith.mulf %114, %114 : vector<16x32xf32>
    %cst_61 = arith.constant dense<0.000000e+00> : vector<16xf32>
    %124 = vector.multi_reduction <add>, %123, %cst_61 [1] : vector<16x32xf32> to vector<16xf32>
    %125 = vector.shape_cast %124 : vector<16xf32> to vector<16x1xf32>
    %cst_62 = arith.constant 3.200000e+01 : f32
    %126 = vector.broadcast %cst_62 : f32 to vector<16x1xf32>
    %127 = arith.divf %125, %126 : vector<16x1xf32>
    %128 = arith.mulf %122, %122 : vector<16x1xf32>
    %129 = arith.subf %127, %128 : vector<16x1xf32>
    %130 = vector.broadcast %122 : vector<16x1xf32> to vector<16x32xf32>
    %131 = arith.subf %114, %130 : vector<16x32xf32>
    %cst_63 = arith.constant 9.99999974E-6 : f32
    %132 = vector.broadcast %cst_63 : f32 to vector<16x1xf32>
    %133 = arith.addf %129, %132 : vector<16x1xf32>
    %134 = math.rsqrt %133 : vector<16x1xf32>
    %135 = vector.broadcast %134 : vector<16x1xf32> to vector<16x32xf32>
    %136 = arith.mulf %131, %135 : vector<16x32xf32>
    %137 = vector.broadcast %116 : vector<1x32xf32> to vector<16x32xf32>
    %138 = arith.mulf %136, %137 : vector<16x32xf32>
    %139 = vector.broadcast %118 : vector<1x32xf32> to vector<16x32xf32>
    %140 = arith.addf %138, %139 : vector<16x32xf32>
    %c0_64 = arith.constant 0 : index
    %c0_65 = arith.constant 0 : index
    %141 = vector.load %arg18[%c0_64, %c0_65] : memref<16x32xf32, #tpu.memory_space<vmem>>, vector<16x32xf32>
    tpu.vector_store %arg18[%c0_64, %c0_65], %140 {strides = array<i32>} : memref<16x32xf32, #tpu.memory_space<vmem>>, vector<16x32xf32>,
    %c1_i32 = arith.constant 1 : i32
    %142 = arith.cmpi eq, %arg0, %c1_i32 : i32
    %143 = arith.extui %142 : i1 to i32
    %c0_i32_66 = arith.constant 0 : i32
    %144 = arith.cmpi ne, %143, %c0_i32_66 : i32
    scf.if %144 {
      %c0_67 = arith.constant 0 : index
      %c0_68 = arith.constant 0 : index
      %145 = vector.load %arg17[%c0_67, %c0_68] : memref<16x32xf32, #tpu.memory_space<vmem>>, vector<16x32xf32>
      tpu.vector_store %arg17[%c0_67, %c0_68], %140 {strides = array<i32>} : memref<16x32xf32, #tpu.memory_space<vmem>>, vector<16x32xf32>,
    } else {
    }
    return
  }
  func.func @transform_0(%arg0: i32) -> (i32, i32) {
    %c0_i32 = arith.constant 0 : i32
    %c0_i32_0 = arith.constant 0 : i32
    %c0_i32_1 = arith.constant 0 : i32
    return %c0_i32, %c0_i32_0 : i32, i32
  }
  func.func @transform_1(%arg0: i32) -> (i32, i32) {
    %c0_i32 = arith.constant 0 : i32
    %c0_i32_0 = arith.constant 0 : i32
    %c0_i32_1 = arith.constant 0 : i32
    return %c0_i32, %c0_i32_0 : i32, i32
  }
  func.func @transform_2(%arg0: i32) -> (i32, i32) {
    %c0_i32 = arith.constant 0 : i32
    %c0_i32_0 = arith.constant 0 : i32
    %c0_i32_1 = arith.constant 0 : i32
    return %c0_i32, %c0_i32_0 : i32, i32
  }
  func.func @transform_3(%arg0: i32) -> (i32, i32) {
    %c0_i32 = arith.constant 0 : i32
    %c0_i32_0 = arith.constant 0 : i32
    %c0_i32_1 = arith.constant 0 : i32
    return %c0_i32, %c0_i32_0 : i32, i32
  }
  func.func @transform_4(%arg0: i32) -> (i32, i32, i32) {
    %c0_i32 = arith.constant 0 : i32
    %c0_i32_0 = arith.constant 0 : i32
    %c0_i32_1 = arith.constant 0 : i32
    return %arg0, %c0_i32, %c0_i32_0 : i32, i32, i32
  }
  func.func @transform_5(%arg0: i32) -> (i32, i32, i32) {
    %c0_i32 = arith.constant 0 : i32
    %c0_i32_0 = arith.constant 0 : i32
    %c0_i32_1 = arith.constant 0 : i32
    return %arg0, %c0_i32, %c0_i32_0 : i32, i32, i32
  }
  func.func @transform_6(%arg0: i32) -> (i32, i32, i32) {
    %c0_i32 = arith.constant 0 : i32
    %c0_i32_0 = arith.constant 0 : i32
    %c0_i32_1 = arith.constant 0 : i32
    return %arg0, %c0_i32, %c0_i32_0 : i32, i32, i32
  }
  func.func @transform_7(%arg0: i32) -> (i32, i32, i32) {
    %c0_i32 = arith.constant 0 : i32
    %c0_i32_0 = arith.constant 0 : i32
    %c0_i32_1 = arith.constant 0 : i32
    return %arg0, %c0_i32, %c0_i32_0 : i32, i32, i32
  }
  func.func @transform_8(%arg0: i32) -> (i32, i32, i32) {
    %c0_i32 = arith.constant 0 : i32
    %c0_i32_0 = arith.constant 0 : i32
    %c0_i32_1 = arith.constant 0 : i32
    return %arg0, %c0_i32, %c0_i32_0 : i32, i32, i32
  }
  func.func @transform_9(%arg0: i32) -> (i32, i32, i32) {
    %c0_i32 = arith.constant 0 : i32
    %c0_i32_0 = arith.constant 0 : i32
    %c0_i32_1 = arith.constant 0 : i32
    return %arg0, %c0_i32, %c0_i32_0 : i32, i32, i32
  }
  func.func @transform_10(%arg0: i32) -> (i32, i32, i32) {
    %c0_i32 = arith.constant 0 : i32
    %c0_i32_0 = arith.constant 0 : i32
    %c0_i32_1 = arith.constant 0 : i32
    return %arg0, %c0_i32, %c0_i32_0 : i32, i32, i32
  }
  func.func @transform_11(%arg0: i32) -> (i32, i32, i32) {
    %c0_i32 = arith.constant 0 : i32
    %c0_i32_0 = arith.constant 0 : i32
    %c0_i32_1 = arith.constant 0 : i32
    return %arg0, %c0_i32, %c0_i32_0 : i32, i32, i32
  }
  func.func @transform_12(%arg0: i32) -> (i32, i32, i32) {
    %c0_i32 = arith.constant 0 : i32
    %c0_i32_0 = arith.constant 0 : i32
    %c0_i32_1 = arith.constant 0 : i32
    return %arg0, %c0_i32, %c0_i32_0 : i32, i32, i32
  }
  func.func @transform_13(%arg0: i32) -> (i32, i32, i32) {
    %c0_i32 = arith.constant 0 : i32
    %c0_i32_0 = arith.constant 0 : i32
    %c0_i32_1 = arith.constant 0 : i32
    return %arg0, %c0_i32, %c0_i32_0 : i32, i32, i32
  }
  func.func @transform_14(%arg0: i32) -> (i32, i32, i32) {
    %c0_i32 = arith.constant 0 : i32
    %c0_i32_0 = arith.constant 0 : i32
    %c0_i32_1 = arith.constant 0 : i32
    return %arg0, %c0_i32, %c0_i32_0 : i32, i32, i32
  }
  func.func @transform_15(%arg0: i32) -> (i32, i32, i32) {
    %c0_i32 = arith.constant 0 : i32
    %c0_i32_0 = arith.constant 0 : i32
    %c0_i32_1 = arith.constant 0 : i32
    return %arg0, %c0_i32, %c0_i32_0 : i32, i32, i32
  }
  func.func @transform_16(%arg0: i32) -> (i32, i32) {
    %c0_i32 = arith.constant 0 : i32
    %c0_i32_0 = arith.constant 0 : i32
    %c0_i32_1 = arith.constant 0 : i32
    return %c0_i32, %c0_i32_0 : i32, i32
  }
}

</mosaic_0001>

<llo_original>
// kernel: _lambda_.1
$region0: #{_lambda_.1}
  #allocation0 [shape = 'u32[]', space=smem, size = 0x4, offset = 0x4, fixed_abs, tag = 'smem constant byte address 0x4 - core index']
  #allocation1 [shape = 'u32[144,128]{1,0:T(1,128)}', space=vmem, size = 0x12000, scoped, tag = 'internal scratch']
  #allocation2 [shape = 'f32[16,32]{1,0:T(8,128)}', space=vmem, size = 0x2000, scoped, tag = 'scratch operand']
  %s0 = inlined_call_operand.vmem [shape: f32[16,32], index: 0, kind: input, shape index: {}]
  %s1 = inlined_call_operand.vmem [shape: f32[16,32], index: 1, kind: input, shape index: {}]
  %s2 = inlined_call_operand.vmem [shape: bf16[32,32], index: 2, kind: input, shape index: {}]
  %s3 = inlined_call_operand.vmem [shape: f32[1,32], index: 3, kind: input, shape index: {}]
  %s4 = inlined_call_operand.vmem [shape: bf16[2,32,48], index: 4, kind: input, shape index: {}]
  %s5 = inlined_call_operand.vmem [shape: f32[2,1,48], index: 5, kind: input, shape index: {}]
  %s6 = inlined_call_operand.vmem [shape: bf16[2,16,32], index: 6, kind: input, shape index: {}]
  %s7 = inlined_call_operand.vmem [shape: f32[2,1,32], index: 7, kind: input, shape index: {}]
  %s8 = inlined_call_operand.vmem [shape: f32[2,1,32], index: 8, kind: input, shape index: {}, may-alias: {8,14}]
  %s9 = inlined_call_operand.vmem [shape: f32[2,1,32], index: 9, kind: input, shape index: {}, may-alias: {9,15}]
  %s10 = inlined_call_operand.vmem [shape: bf16[2,32,64], index: 10, kind: input, shape index: {}]
  %s11 = inlined_call_operand.vmem [shape: f32[2,1,64], index: 11, kind: input, shape index: {}]
  %s12 = inlined_call_operand.vmem [shape: bf16[2,64,32], index: 12, kind: input, shape index: {}]
  %s13 = inlined_call_operand.vmem [shape: f32[2,1,32], index: 13, kind: input, shape index: {}]
  %s14 = inlined_call_operand.vmem [shape: f32[2,1,32], index: 14, kind: input, shape index: {}, may-alias: {8,14}]
  %s15 = inlined_call_operand.vmem [shape: f32[2,1,32], index: 15, kind: input, shape index: {}, may-alias: {9,15}]
  %s16 = inlined_call_operand.hbm [shape: f32[16,32], index: 16, kind: output, shape index: {}]
  %s17 = sld [smem:[#allocation0]]
  $region105: #{_lambda_.1} parent=0
    _
  %s19 = ssub.s32 1, %s17
  %s20 = scalar_select 0, %s19, %s17
  $region1: #{_lambda_.1} parent=0
    #allocation3 [shape = 'u8[8192]{0}', space=vmem, size = 0x2000, scoped, tag = 'output window, operand 0, single buffered']
    #allocation4 [shape = 's32[2]{0}', space=sflag, size = 0x8, scoped, tag = 'scoped memory for _lambda_.1']
    %21 = vsyncpa [#allocation4], 0
    loop: start=0, step=1, limit=4
    $region2: #{_lambda_.1} parent=1 // loop_pre_header
      _
    $region3: #{_lambda_.1} parent=1 // loop_header
      %s23 = sphi 0, %s27
      %p24 = scmp.ge.s32.totalorder %s23, 4
      %s31 = sphi 0, %s31
      %s33 = sphi 0, %s31
      %s34 = sphi 0, %s33
      %s48 = sphi 0, %s34
      %s52 = sphi 0, %s52
      %s54 = sphi 0, %s52
      %s55 = sphi 0, %s54
      %s69 = sphi 0, %s55
      %s73 = sphi 0, %s73
      %s75 = sphi 0, %s73
      %s76 = sphi 0, %s75
      %s90 = sphi 0, %s76
      %s94 = sphi 0, %s94
      %s96 = sphi 0, %s94
      %s97 = sphi 0, %s96
      %s111 = sphi 0, %s97
      %s117 = sphi 0, %s119
      %s120 = sphi 0, %s117
      %s121 = sphi 0, %s120
      %s137 = sphi 0, %s121
      %s143 = sphi 0, %s145
      %s146 = sphi 0, %s143
      %s147 = sphi 0, %s146
      %s163 = sphi 0, %s147
      %s169 = sphi 0, %s171
      %s172 = sphi 0, %s169
      %s173 = sphi 0, %s172
      %s189 = sphi 0, %s173
      %s195 = sphi 0, %s197
      %s198 = sphi 0, %s195
      %s199 = sphi 0, %s198
      %s215 = sphi 0, %s199
      %s221 = sphi 0, %s223
      %s224 = sphi 0, %s221
      %s225 = sphi 0, %s224
      %s241 = sphi 0, %s225
      %s247 = sphi 0, %s249
      %s250 = sphi 0, %s247
      %s251 = sphi 0, %s250
      %s267 = sphi 0, %s251
      %s273 = sphi 0, %s275
      %s276 = sphi 0, %s273
      %s277 = sphi 0, %s276
      %s293 = sphi 0, %s277
      %s299 = sphi 0, %s301
      %s302 = sphi 0, %s299
      %s303 = sphi 0, %s302
      %s319 = sphi 0, %s303
      %s325 = sphi 0, %s327
      %s328 = sphi 0, %s325
      %s329 = sphi 0, %s328
      %s345 = sphi 0, %s329
      %s351 = sphi 0, %s353
      %s354 = sphi 0, %s351
      %s355 = sphi 0, %s354
      %s371 = sphi 0, %s355
      %s377 = sphi 0, %s379
      %s380 = sphi 0, %s377
      %s381 = sphi 0, %s380
      %s397 = sphi 0, %s381
      %s403 = sphi 0, %s405
      %s406 = sphi 0, %s403
      %s407 = sphi 0, %s406
      %s423 = sphi 0, %s407
      %s427 = sphi 0, %s427
      %s429 = sphi 0, %s427
      %s430 = sphi 0, %s429
      %s444 = sphi 0, %s430
    $region4: #{_lambda_.1} parent=1 // loop_header_branch
      %26 = sbr.rel (%p24) target = $region8
    $region5: #{_lambda_.1} parent=1 // loop_body
      %s28 = ssub.s32 %s23, 1
      %s29 = ssub.s32 %s23, 2
      %s30 = sadd.s32 %s23, 1
      %s32 = sadd.s32 %s31, 1
      %p35 = scmp.eq.s32.totalorder %s23, 1
      %p36 = scmp.ne.s32.totalorder %s31, %s33
      %p37 = scmp.eq.s32.totalorder %s23, 0
      %p38 = por %p36, %p37
      %p39 = scmp.ne.s32.totalorder %s31, %s33
      %p40 = scmp.eq.s32.totalorder %s28, 1
      %p41 = por %p39, %p40
      %p42 = scmp.ne.s32.totalorder %s33, %s34
      %p43 = scmp.eq.s32.totalorder %s28, 0
      %p44 = por %p42, %p43
      %p45 = scmp.ne.s32.totalorder %s33, %s34
      %p46 = scmp.eq.s32.totalorder %s29, 1
      %p47 = por %p45, %p46
      %p49 = scmp.ne.s32.totalorder %s34, %s48
      %p50 = scmp.eq.s32.totalorder %s29, 0
      %p51 = por %p49, %p50
      %s53 = sadd.s32 %s52, 1
      %p56 = scmp.eq.s32.totalorder %s23, 1
      %p57 = scmp.ne.s32.totalorder %s52, %s54
      %p58 = scmp.eq.s32.totalorder %s23, 0
      %p59 = por %p57, %p58
      %p60 = scmp.ne.s32.totalorder %s52, %s54
      %p61 = scmp.eq.s32.totalorder %s28, 1
      %p62 = por %p60, %p61
      %p63 = scmp.ne.s32.totalorder %s54, %s55
      %p64 = scmp.eq.s32.totalorder %s28, 0
      %p65 = por %p63, %p64
      %p66 = scmp.ne.s32.totalorder %s54, %s55
      %p67 = scmp.eq.s32.totalorder %s29, 1
      %p68 = por %p66, %p67
      %p70 = scmp.ne.s32.totalorder %s55, %s69
      %p71 = scmp.eq.s32.totalorder %s29, 0
      %p72 = por %p70, %p71
      %s74 = sadd.s32 %s73, 1
      %p77 = scmp.eq.s32.totalorder %s23, 1
      %p78 = scmp.ne.s32.totalorder %s73, %s75
      %p79 = scmp.eq.s32.totalorder %s23, 0
      %p80 = por %p78, %p79
      %p81 = scmp.ne.s32.totalorder %s73, %s75
      %p82 = scmp.eq.s32.totalorder %s28, 1
      %p83 = por %p81, %p82
      %p84 = scmp.ne.s32.totalorder %s75, %s76
      %p85 = scmp.eq.s32.totalorder %s28, 0
      %p86 = por %p84, %p85
      %p87 = scmp.ne.s32.totalorder %s75, %s76
      %p88 = scmp.eq.s32.totalorder %s29, 1
      %p89 = por %p87, %p88
      %p91 = scmp.ne.s32.totalorder %s76, %s90
      %p92 = scmp.eq.s32.totalorder %s29, 0
      %p93 = por %p91, %p92
      %s95 = sadd.s32 %s94, 1
      %p98 = scmp.eq.s32.totalorder %s23, 1
      %p99 = scmp.ne.s32.totalorder %s94, %s96
      %p100 = scmp.eq.s32.totalorder %s23, 0
      %p101 = por %p99, %p100
      %p102 = scmp.ne.s32.totalorder %s94, %s96
      %p103 = scmp.eq.s32.totalorder %s28, 1
      %p104 = por %p102, %p103
      %p105 = scmp.ne.s32.totalorder %s96, %s97
      %p106 = scmp.eq.s32.totalorder %s28, 0
      %p107 = por %p105, %p106
      %p108 = scmp.ne.s32.totalorder %s96, %s97
      %p109 = scmp.eq.s32.totalorder %s29, 1
      %p110 = por %p108, %p109
      %p112 = scmp.ne.s32.totalorder %s97, %s111
      %p113 = scmp.eq.s32.totalorder %s29, 0
      %p114 = por %p112, %p113
      %s115 = ssub.s32 %s23, %s30
      %p116 = scmp.eq.s32.totalorder %s115, 0
      %s118 = sadd.s32 %s117, 1
      %s119 = scalar_select %p116, %s117, %s118
      %p122 = pneg %p116
      %p123 = scmp.eq.s32.totalorder %s23, 1
      %p124 = por %p122, %p123
      %p125 = scmp.ne.s32.totalorder %s117, %s120
      %p126 = scmp.eq.s32.totalorder %s23, 0
      %p127 = por %p125, %p126
      %p128 = scmp.ne.s32.totalorder %s117, %s120
      %p129 = scmp.eq.s32.totalorder %s28, 1
      %p130 = por %p128, %p129
      %p131 = scmp.ne.s32.totalorder %s120, %s121
      %p132 = scmp.eq.s32.totalorder %s28, 0
      %p133 = por %p131, %p132
      %p134 = scmp.ne.s32.totalorder %s120, %s121
      %p135 = scmp.eq.s32.totalorder %s29, 1
      %p136 = por %p134, %p135
      %p138 = scmp.ne.s32.totalorder %s121, %s137
      %p139 = scmp.eq.s32.totalorder %s29, 0
      %p140 = por %p138, %p139
      %s141 = ssub.s32 %s23, %s30
      %p142 = scmp.eq.s32.totalorder %s141, 0
      %s144 = sadd.s32 %s143, 1
      %s145 = scalar_select %p142, %s143, %s144
      %p148 = pneg %p142
      %p149 = scmp.eq.s32.totalorder %s23, 1
      %p150 = por %p148, %p149
      %p151 = scmp.ne.s32.totalorder %s143, %s146
      %p152 = scmp.eq.s32.totalorder %s23, 0
      %p153 = por %p151, %p152
      %p154 = scmp.ne.s32.totalorder %s143, %s146
      %p155 = scmp.eq.s32.totalorder %s28, 1
      %p156 = por %p154, %p155
      %p157 = scmp.ne.s32.totalorder %s146, %s147
      %p158 = scmp.eq.s32.totalorder %s28, 0
      %p159 = por %p157, %p158
      %p160 = scmp.ne.s32.totalorder %s146, %s147
      %p161 = scmp.eq.s32.totalorder %s29, 1
      %p162 = por %p160, %p161
      %p164 = scmp.ne.s32.totalorder %s147, %s163
      %p165 = scmp.eq.s32.totalorder %s29, 0
      %p166 = por %p164, %p165
      %s167 = ssub.s32 %s23, %s30
      %p168 = scmp.eq.s32.totalorder %s167, 0
      %s170 = sadd.s32 %s169, 1
      %s171 = scalar_select %p168, %s169, %s170
      %p174 = pneg %p168
      %p175 = scmp.eq.s32.totalorder %s23, 1
      %p176 = por %p174, %p175
      %p177 = scmp.ne.s32.totalorder %s169, %s172
      %p178 = scmp.eq.s32.totalorder %s23, 0
      %p179 = por %p177, %p178
      %p180 = scmp.ne.s32.totalorder %s169, %s172
      %p181 = scmp.eq.s32.totalorder %s28, 1
      %p182 = por %p180, %p181
      %p183 = scmp.ne.s32.totalorder %s172, %s173
      %p184 = scmp.eq.s32.totalorder %s28, 0
      %p185 = por %p183, %p184
      %p186 = scmp.ne.s32.totalorder %s172, %s173
      %p187 = scmp.eq.s32.totalorder %s29, 1
      %p188 = por %p186, %p187
      %p190 = scmp.ne.s32.totalorder %s173, %s189
      %p191 = scmp.eq.s32.totalorder %s29, 0
      %p192 = por %p190, %p191
      %s193 = ssub.s32 %s23, %s30
      %p194 = scmp.eq.s32.totalorder %s193, 0
      %s196 = sadd.s32 %s195, 1
      %s197 = scalar_select %p194, %s195, %s196
      %p200 = pneg %p194
      %p201 = scmp.eq.s32.totalorder %s23, 1
      %p202 = por %p200, %p201
      %p203 = scmp.ne.s32.totalorder %s195, %s198
      %p204 = scmp.eq.s32.totalorder %s23, 0
      %p205 = por %p203, %p204
      %p206 = scmp.ne.s32.totalorder %s195, %s198
      %p207 = scmp.eq.s32.totalorder %s28, 1
      %p208 = por %p206, %p207
      %p209 = scmp.ne.s32.totalorder %s198, %s199
      %p210 = scmp.eq.s32.totalorder %s28, 0
      %p211 = por %p209, %p210
      %p212 = scmp.ne.s32.totalorder %s198, %s199
      %p213 = scmp.eq.s32.totalorder %s29, 1
      %p214 = por %p212, %p213
      %p216 = scmp.ne.s32.totalorder %s199, %s215
      %p217 = scmp.eq.s32.totalorder %s29, 0
      %p218 = por %p216, %p217
      %s219 = ssub.s32 %s23, %s30
      %p220 = scmp.eq.s32.totalorder %s219, 0
      %s222 = sadd.s32 %s221, 1
      %s223 = scalar_select %p220, %s221, %s222
      %p226 = pneg %p220
      %p227 = scmp.eq.s32.totalorder %s23, 1
      %p228 = por %p226, %p227
      %p229 = scmp.ne.s32.totalorder %s221, %s224
      %p230 = scmp.eq.s32.totalorder %s23, 0
      %p231 = por %p229, %p230
      %p232 = scmp.ne.s32.totalorder %s221, %s224
      %p233 = scmp.eq.s32.totalorder %s28, 1
      %p234 = por %p232, %p233
      %p235 = scmp.ne.s32.totalorder %s224, %s225
      %p236 = scmp.eq.s32.totalorder %s28, 0
      %p237 = por %p235, %p236
      %p238 = scmp.ne.s32.totalorder %s224, %s225
      %p239 = scmp.eq.s32.totalorder %s29, 1
      %p240 = por %p238, %p239
      %p242 = scmp.ne.s32.totalorder %s225, %s241
      %p243 = scmp.eq.s32.totalorder %s29, 0
      %p244 = por %p242, %p243
      %s245 = ssub.s32 %s23, %s30
      %p246 = scmp.eq.s32.totalorder %s245, 0
      %s248 = sadd.s32 %s247, 1
      %s249 = scalar_select %p246, %s247, %s248
      %p252 = pneg %p246
      %p253 = scmp.eq.s32.totalorder %s23, 1
      %p254 = por %p252, %p253
      %p255 = scmp.ne.s32.totalorder %s247, %s250
      %p256 = scmp.eq.s32.totalorder %s23, 0
      %p257 = por %p255, %p256
      %p258 = scmp.ne.s32.totalorder %s247, %s250
      %p259 = scmp.eq.s32.totalorder %s28, 1
      %p260 = por %p258, %p259
      %p261 = scmp.ne.s32.totalorder %s250, %s251
      %p262 = scmp.eq.s32.totalorder %s28, 0
      %p263 = por %p261, %p262
      %p264 = scmp.ne.s32.totalorder %s250, %s251
      %p265 = scmp.eq.s32.totalorder %s29, 1
      %p266 = por %p264, %p265
      %p268 = scmp.ne.s32.totalorder %s251, %s267
      %p269 = scmp.eq.s32.totalorder %s29, 0
      %p270 = por %p268, %p269
      %s271 = ssub.s32 %s23, %s30
      %p272 = scmp.eq.s32.totalorder %s271, 0
      %s274 = sadd.s32 %s273, 1
      %s275 = scalar_select %p272, %s273, %s274
      %p278 = pneg %p272
      %p279 = scmp.eq.s32.totalorder %s23, 1
      %p280 = por %p278, %p279
      %p281 = scmp.ne.s32.totalorder %s273, %s276
      %p282 = scmp.eq.s32.totalorder %s23, 0
      %p283 = por %p281, %p282
      %p284 = scmp.ne.s32.totalorder %s273, %s276
      %p285 = scmp.eq.s32.totalorder %s28, 1
      %p286 = por %p284, %p285
      %p287 = scmp.ne.s32.totalorder %s276, %s277
      %p288 = scmp.eq.s32.totalorder %s28, 0
      %p289 = por %p287, %p288
      %p290 = scmp.ne.s32.totalorder %s276, %s277
      %p291 = scmp.eq.s32.totalorder %s29, 1
      %p292 = por %p290, %p291
      %p294 = scmp.ne.s32.totalorder %s277, %s293
      %p295 = scmp.eq.s32.totalorder %s29, 0
      %p296 = por %p294, %p295
      %s297 = ssub.s32 %s23, %s30
      %p298 = scmp.eq.s32.totalorder %s297, 0
      %s300 = sadd.s32 %s299, 1
      %s301 = scalar_select %p298, %s299, %s300
      %p304 = pneg %p298
      %p305 = scmp.eq.s32.totalorder %s23, 1
      %p306 = por %p304, %p305
      %p307 = scmp.ne.s32.totalorder %s299, %s302
      %p308 = scmp.eq.s32.totalorder %s23, 0
      %p309 = por %p307, %p308
      %p310 = scmp.ne.s32.totalorder %s299, %s302
      %p311 = scmp.eq.s32.totalorder %s28, 1
      %p312 = por %p310, %p311
      %p313 = scmp.ne.s32.totalorder %s302, %s303
      %p314 = scmp.eq.s32.totalorder %s28, 0
      %p315 = por %p313, %p314
      %p316 = scmp.ne.s32.totalorder %s302, %s303
      %p317 = scmp.eq.s32.totalorder %s29, 1
      %p318 = por %p316, %p317
      %p320 = scmp.ne.s32.totalorder %s303, %s319
      %p321 = scmp.eq.s32.totalorder %s29, 0
      %p322 = por %p320, %p321
      %s323 = ssub.s32 %s23, %s30
      %p324 = scmp.eq.s32.totalorder %s323, 0
      %s326 = sadd.s32 %s325, 1
      %s327 = scalar_select %p324, %s325, %s326
      %p330 = pneg %p324
      %p331 = scmp.eq.s32.totalorder %s23, 1
      %p332 = por %p330, %p331
      %p333 = scmp.ne.s32.totalorder %s325, %s328
      %p334 = scmp.eq.s32.totalorder %s23, 0
      %p335 = por %p333, %p334
      %p336 = scmp.ne.s32.totalorder %s325, %s328
      %p337 = scmp.eq.s32.totalorder %s28, 1
      %p338 = por %p336, %p337
      %p339 = scmp.ne.s32.totalorder %s328, %s329
      %p340 = scmp.eq.s32.totalorder %s28, 0
      %p341 = por %p339, %p340
      %p342 = scmp.ne.s32.totalorder %s328, %s329
      %p343 = scmp.eq.s32.totalorder %s29, 1
      %p344 = por %p342, %p343
      %p346 = scmp.ne.s32.totalorder %s329, %s345
      %p347 = scmp.eq.s32.totalorder %s29, 0
      %p348 = por %p346, %p347
      %s349 = ssub.s32 %s23, %s30
      %p350 = scmp.eq.s32.totalorder %s349, 0
      %s352 = sadd.s32 %s351, 1
      %s353 = scalar_select %p350, %s351, %s352
      %p356 = pneg %p350
      %p357 = scmp.eq.s32.totalorder %s23, 1
      %p358 = por %p356, %p357
      %p359 = scmp.ne.s32.totalorder %s351, %s354
      %p360 = scmp.eq.s32.totalorder %s23, 0
      %p361 = por %p359, %p360
      %p362 = scmp.ne.s32.totalorder %s351, %s354
      %p363 = scmp.eq.s32.totalorder %s28, 1
      %p364 = por %p362, %p363
      %p365 = scmp.ne.s32.totalorder %s354, %s355
      %p366 = scmp.eq.s32.totalorder %s28, 0
      %p367 = por %p365, %p366
      %p368 = scmp.ne.s32.totalorder %s354, %s355
      %p369 = scmp.eq.s32.totalorder %s29, 1
      %p370 = por %p368, %p369
      %p372 = scmp.ne.s32.totalorder %s355, %s371
      %p373 = scmp.eq.s32.totalorder %s29, 0
      %p374 = por %p372, %p373
      %s375 = ssub.s32 %s23, %s30
      %p376 = scmp.eq.s32.totalorder %s375, 0
      %s378 = sadd.s32 %s377, 1
      %s379 = scalar_select %p376, %s377, %s378
      %p382 = pneg %p376
      %p383 = scmp.eq.s32.totalorder %s23, 1
      %p384 = por %p382, %p383
      %p385 = scmp.ne.s32.totalorder %s377, %s380
      %p386 = scmp.eq.s32.totalorder %s23, 0
      %p387 = por %p385, %p386
      %p388 = scmp.ne.s32.totalorder %s377, %s380
      %p389 = scmp.eq.s32.totalorder %s28, 1
      %p390 = por %p388, %p389
      %p391 = scmp.ne.s32.totalorder %s380, %s381
      %p392 = scmp.eq.s32.totalorder %s28, 0
      %p393 = por %p391, %p392
      %p394 = scmp.ne.s32.totalorder %s380, %s381
      %p395 = scmp.eq.s32.totalorder %s29, 1
      %p396 = por %p394, %p395
      %p398 = scmp.ne.s32.totalorder %s381, %s397
      %p399 = scmp.eq.s32.totalorder %s29, 0
      %p400 = por %p398, %p399
      %s401 = ssub.s32 %s23, %s30
      %p402 = scmp.eq.s32.totalorder %s401, 0
      %s404 = sadd.s32 %s403, 1
      %s405 = scalar_select %p402, %s403, %s404
      %p408 = pneg %p402
      %p409 = scmp.eq.s32.totalorder %s23, 1
      %p410 = por %p408, %p409
      %p411 = scmp.ne.s32.totalorder %s403, %s406
      %p412 = scmp.eq.s32.totalorder %s23, 0
      %p413 = por %p411, %p412
      %p414 = scmp.ne.s32.totalorder %s403, %s406
      %p415 = scmp.eq.s32.totalorder %s28, 1
      %p416 = por %p414, %p415
      %p417 = scmp.ne.s32.totalorder %s406, %s407
      %p418 = scmp.eq.s32.totalorder %s28, 0
      %p419 = por %p417, %p418
      %p420 = scmp.ne.s32.totalorder %s406, %s407
      %p421 = scmp.eq.s32.totalorder %s29, 1
      %p422 = por %p420, %p421
      %p424 = scmp.ne.s32.totalorder %s407, %s423
      %p425 = scmp.eq.s32.totalorder %s29, 0
      %p426 = por %p424, %p425
      %s428 = sadd.s32 %s427, 1
      %p431 = scmp.eq.s32.totalorder %s23, 1
      %p432 = scmp.ne.s32.totalorder %s427, %s429
      %p433 = scmp.eq.s32.totalorder %s23, 0
      %p434 = por %p432, %p433
      %p435 = scmp.ne.s32.totalorder %s427, %s429
      %p436 = scmp.eq.s32.totalorder %s28, 1
      %p437 = por %p435, %p436
      %p438 = scmp.ne.s32.totalorder %s429, %s430
      %p439 = scmp.eq.s32.totalorder %s28, 0
      %p440 = por %p438, %p439
      %p441 = scmp.ne.s32.totalorder %s429, %s430
      %p442 = scmp.eq.s32.totalorder %s29, 1
      %p443 = por %p441, %p442
      %p445 = scmp.ne.s32.totalorder %s430, %s444
      %p446 = scmp.eq.s32.totalorder %s29, 0
      %p447 = por %p445, %p446
      %p448 = scmp.le.s32.totalorder 1, %s23
      %p449 = scmp.lt.s32.totalorder %s23, 3
      %p450 = pnand %p448, %p449
      %p451 = pneg %p450
      // Predicated region
      $region9: #{_lambda_.1} parent=5 // pred_check
        _
      $region10: #{_lambda_.1} parent=5 // pred_check_branch
        %453 = sbr.rel (%p450) target = $region12
      $region11: #{_lambda_.1} parent=5 // pred_region
        %s454 = ssub.s32 %s23, 1
        // Predicated region
        $region13: #{_lambda_.1} parent=11 // pred_check
          %p455 = pneg %p44
        $region14: #{_lambda_.1} parent=11 // pred_check_branch
          %457 = sbr.rel (%p455) target = $region16
        $region15: #{_lambda_.1} parent=11 // pred_region
          _
        $region16: #{_lambda_.1} parent=11 // pred_fallthru
          _
        // Predicated region
        $region17: #{_lambda_.1} parent=11 // pred_check
          %p458 = pneg %p65
        $region18: #{_lambda_.1} parent=11 // pred_check_branch
          %460 = sbr.rel (%p458) target = $region20
        $region19: #{_lambda_.1} parent=11 // pred_region
          _
        $region20: #{_lambda_.1} parent=11 // pred_fallthru
          _
        // Predicated region
        $region21: #{_lambda_.1} parent=11 // pred_check
          %p461 = pneg %p86
        $region22: #{_lambda_.1} parent=11 // pred_check_branch
          %463 = sbr.rel (%p461) target = $region24
        $region23: #{_lambda_.1} parent=11 // pred_region
          _
        $region24: #{_lambda_.1} parent=11 // pred_fallthru
          _
        // Predicated region
        $region25: #{_lambda_.1} parent=11 // pred_check
          %p464 = pneg %p107
        $region26: #{_lambda_.1} parent=11 // pred_check_branch
          %466 = sbr.rel (%p464) target = $region28
        $region27: #{_lambda_.1} parent=11 // pred_region
          _
        $region28: #{_lambda_.1} parent=11 // pred_fallthru
          _
      $region12: #{_lambda_.1} parent=5 // pred_fallthru
        _
      %p467 = scmp.lt.s32.totalorder %s23, 2
      // Predicated region
      $region29: #{_lambda_.1} parent=5 // pred_check
        %p468 = pneg %p467
      $region30: #{_lambda_.1} parent=5 // pred_check_branch
        %470 = sbr.rel (%p468) target = $region32
      $region31: #{_lambda_.1} parent=5 // pred_region
        // Predicated region
        $region33: #{_lambda_.1} parent=31 // pred_check
          %p471 = pneg %p127
        $region34: #{_lambda_.1} parent=31 // pred_check_branch
          %473 = sbr.rel (%p471) target = $region36
        $region35: #{_lambda_.1} parent=31 // pred_region
          %p474 = scmp.lt.s32.totalorder %s23, 1
          %s475 = scalar_select %p474, %s23, 1
          %s476 = smul.addr %s475, 4
          %s477 = smul.addr %s476, 4
          %s478 = scalar_lea.vmem %s4, %s477
        $region36: #{_lambda_.1} parent=31 // pred_fallthru
          _
        // Predicated region
        $region37: #{_lambda_.1} parent=31 // pred_check
          %p479 = pneg %p153
        $region38: #{_lambda_.1} parent=31 // pred_check_branch
          %481 = sbr.rel (%p479) target = $region40
        $region39: #{_lambda_.1} parent=31 // pred_region
          %p482 = scmp.lt.s32.totalorder %s23, 1
          %s483 = scalar_select %p482, %s23, 1
          %s484 = scalar_lea.vmem %s5, %s483
        $region40: #{_lambda_.1} parent=31 // pred_fallthru
          _
        // Predicated region
        $region41: #{_lambda_.1} parent=31 // pred_check
          %p485 = pneg %p179
        $region42: #{_lambda_.1} parent=31 // pred_check_branch
          %487 = sbr.rel (%p485) target = $region44
        $region43: #{_lambda_.1} parent=31 // pred_region
          %p488 = scmp.lt.s32.totalorder %s23, 1
          %s489 = scalar_select %p488, %s23, 1
          %s490 = smul.addr %s489, 2
          %s491 = smul.addr %s490, 4
          %s492 = scalar_lea.vmem %s6, %s491
        $region44: #{_lambda_.1} parent=31 // pred_fallthru
          _
        // Predicated region
        $region45: #{_lambda_.1} parent=31 // pred_check
          %p493 = pneg %p205
        $region46: #{_lambda_.1} parent=31 // pred_check_branch
          %495 = sbr.rel (%p493) target = $region48
        $region47: #{_lambda_.1} parent=31 // pred_region
          %p496 = scmp.lt.s32.totalorder %s23, 1
          %s497 = scalar_select %p496, %s23, 1
          %s498 = scalar_lea.vmem %s7, %s497
        $region48: #{_lambda_.1} parent=31 // pred_fallthru
          _
        // Predicated region
        $region49: #{_lambda_.1} parent=31 // pred_check
          %p499 = pneg %p231
        $region50: #{_lambda_.1} parent=31 // pred_check_branch
          %501 = sbr.rel (%p499) target = $region52
        $region51: #{_lambda_.1} parent=31 // pred_region
          %p502 = scmp.lt.s32.totalorder %s23, 1
          %s503 = scalar_select %p502, %s23, 1
          %s504 = scalar_lea.vmem %s8, %s503
        $region52: #{_lambda_.1} parent=31 // pred_fallthru
          _
        // Predicated region
        $region53: #{_lambda_.1} parent=31 // pred_check
          %p505 = pneg %p257
        $region54: #{_lambda_.1} parent=31 // pred_check_branch
          %507 = sbr.rel (%p505) target = $region56
        $region55: #{_lambda_.1} parent=31 // pred_region
          %p508 = scmp.lt.s32.totalorder %s23, 1
          %s509 = scalar_select %p508, %s23, 1
          %s510 = scalar_lea.vmem %s9, %s509
        $region56: #{_lambda_.1} parent=31 // pred_fallthru
          _
        // Predicated region
        $region57: #{_lambda_.1} parent=31 // pred_check
          %p511 = pneg %p283
        $region58: #{_lambda_.1} parent=31 // pred_check_branch
          %513 = sbr.rel (%p511) target = $region60
        $region59: #{_lambda_.1} parent=31 // pred_region
          %p514 = scmp.lt.s32.totalorder %s23, 1
          %s515 = scalar_select %p514, %s23, 1
          %s516 = smul.addr %s515, 4
          %s517 = smul.addr %s516, 4
          %s518 = scalar_lea.vmem %s10, %s517
        $region60: #{_lambda_.1} parent=31 // pred_fallthru
          _
        // Predicated region
        $region61: #{_lambda_.1} parent=31 // pred_check
          %p519 = pneg %p309
        $region62: #{_lambda_.1} parent=31 // pred_check_branch
          %521 = sbr.rel (%p519) target = $region64
        $region63: #{_lambda_.1} parent=31 // pred_region
          %p522 = scmp.lt.s32.totalorder %s23, 1
          %s523 = scalar_select %p522, %s23, 1
          %s524 = scalar_lea.vmem %s11, %s523
        $region64: #{_lambda_.1} parent=31 // pred_fallthru
          _
        // Predicated region
        $region65: #{_lambda_.1} parent=31 // pred_check
          %p525 = pneg %p335
        $region66: #{_lambda_.1} parent=31 // pred_check_branch
          %527 = sbr.rel (%p525) target = $region68
        $region67: #{_lambda_.1} parent=31 // pred_region
          %p528 = scmp.lt.s32.totalorder %s23, 1
          %s529 = scalar_select %p528, %s23, 1
          %s530 = smul.addr %s529, 8
          %s531 = smul.addr %s530, 4
          %s532 = scalar_lea.vmem %s12, %s531
        $region68: #{_lambda_.1} parent=31 // pred_fallthru
          _
        // Predicated region
        $region69: #{_lambda_.1} parent=31 // pred_check
          %p533 = pneg %p361
        $region70: #{_lambda_.1} parent=31 // pred_check_branch
          %535 = sbr.rel (%p533) target = $region72
        $region71: #{_lambda_.1} parent=31 // pred_region
          %p536 = scmp.lt.s32.totalorder %s23, 1
          %s537 = scalar_select %p536, %s23, 1
          %s538 = scalar_lea.vmem %s13, %s537
        $region72: #{_lambda_.1} parent=31 // pred_fallthru
          _
        // Predicated region
        $region73: #{_lambda_.1} parent=31 // pred_check
          %p539 = pneg %p387
        $region74: #{_lambda_.1} parent=31 // pred_check_branch
          %541 = sbr.rel (%p539) target = $region76
        $region75: #{_lambda_.1} parent=31 // pred_region
          %p542 = scmp.lt.s32.totalorder %s23, 1
          %s543 = scalar_select %p542, %s23, 1
          %s544 = scalar_lea.vmem %s14, %s543
        $region76: #{_lambda_.1} parent=31 // pred_fallthru
          _
        // Predicated region
        $region77: #{_lambda_.1} parent=31 // pred_check
          %p545 = pneg %p413
        $region78: #{_lambda_.1} parent=31 // pred_check_branch
          %547 = sbr.rel (%p545) target = $region80
        $region79: #{_lambda_.1} parent=31 // pred_region
          %p548 = scmp.lt.s32.totalorder %s23, 1
          %s549 = scalar_select %p548, %s23, 1
          %s550 = scalar_lea.vmem %s15, %s549
        $region80: #{_lambda_.1} parent=31 // pred_fallthru
          _
      $region32: #{_lambda_.1} parent=5 // pred_fallthru
        _
      %p551 = scmp.le.s32.totalorder 1, %s23
      %p552 = scmp.lt.s32.totalorder %s23, 3
      %p553 = pnand %p551, %p552
      %p554 = pneg %p553
      // Predicated region
      $region81: #{_lambda_.1} parent=5 // pred_check
        _
      $region82: #{_lambda_.1} parent=5 // pred_check_branch
        %556 = sbr.rel (%p553) target = $region84
      $region83: #{_lambda_.1} parent=5 // pred_region
        %s557 = ssub.s32 %s23, 1
        %p558 = pneg %p44
        %p559 = pneg %p41
        %p560 = pneg %p65
        %p561 = pneg %p62
        %p562 = pneg %p86
        %p563 = pneg %p83
        %p564 = pneg %p107
        %p565 = pneg %p104
        %p566 = scmp.lt.s32.totalorder %s28, 1
        %s567 = scalar_select %p566, %s28, 1
        %s568 = smul.addr %s567, 4
        %s569 = smul.addr %s568, 4
        %s570 = scalar_lea.vmem %s4, %s569
        %p571 = pneg %p133
        %p572 = pneg %p130
        %p573 = scmp.lt.s32.totalorder %s28, 1
        %s574 = scalar_select %p573, %s28, 1
        %s575 = scalar_lea.vmem %s5, %s574
        %p576 = pneg %p159
        %p577 = pneg %p156
        %p578 = scmp.lt.s32.totalorder %s28, 1
        %s579 = scalar_select %p578, %s28, 1
        %s580 = smul.addr %s579, 2
        %s581 = smul.addr %s580, 4
        %s582 = scalar_lea.vmem %s6, %s581
        %p583 = pneg %p185
        %p584 = pneg %p182
        %p585 = scmp.lt.s32.totalorder %s28, 1
        %s586 = scalar_select %p585, %s28, 1
        %s587 = scalar_lea.vmem %s7, %s586
        %p588 = pneg %p211
        %p589 = pneg %p208
        %p590 = scmp.lt.s32.totalorder %s28, 1
        %s591 = scalar_select %p590, %s28, 1
        %s592 = scalar_lea.vmem %s8, %s591
        %p593 = pneg %p237
        %p594 = pneg %p234
        %p595 = scmp.lt.s32.totalorder %s28, 1
        %s596 = scalar_select %p595, %s28, 1
        %s597 = scalar_lea.vmem %s9, %s596
        %p598 = pneg %p263
        %p599 = pneg %p260
        %p600 = scmp.lt.s32.totalorder %s28, 1
        %s601 = scalar_select %p600, %s28, 1
        %s602 = smul.addr %s601, 4
        %s603 = smul.addr %s602, 4
        %s604 = scalar_lea.vmem %s10, %s603
        %p605 = pneg %p289
        %p606 = pneg %p286
        %p607 = scmp.lt.s32.totalorder %s28, 1
        %s608 = scalar_select %p607, %s28, 1
        %s609 = scalar_lea.vmem %s11, %s608
        %p610 = pneg %p315
        %p611 = pneg %p312
        %p612 = scmp.lt.s32.totalorder %s28, 1
        %s613 = scalar_select %p612, %s28, 1
        %s614 = smul.addr %s613, 8
        %s615 = smul.addr %s614, 4
        %s616 = scalar_lea.vmem %s12, %s615
        %p617 = pneg %p341
        %p618 = pneg %p338
        %p619 = scmp.lt.s32.totalorder %s28, 1
        %s620 = scalar_select %p619, %s28, 1
        %s621 = scalar_lea.vmem %s13, %s620
        %p622 = pneg %p367
        %p623 = pneg %p364
        %p624 = scmp.lt.s32.totalorder %s28, 1
        %s625 = scalar_select %p624, %s28, 1
        %s626 = scalar_lea.vmem %s14, %s625
        %p627 = pneg %p393
        %p628 = pneg %p390
        %p629 = scmp.lt.s32.totalorder %s28, 1
        %s630 = scalar_select %p629, %s28, 1
        %s631 = scalar_lea.vmem %s15, %s630
        %p632 = pneg %p419
        %p633 = pneg %p416
        %p634 = pneg %p440
        %p635 = pneg %p437
        %p636 = scmp.lt.s32.totalorder %s28, 1
        %s637 = scalar_select %p636, %s28, 1
        %s638 = smul.addr %s637, 4
        %s639 = smul.addr %s638, 4
        %s640 = scalar_lea.vmem %s4, %s639
        %p641 = scmp.lt.s32.totalorder %s28, 1
        %s642 = scalar_select %p641, %s28, 1
        %s643 = scalar_lea.vmem %s5, %s642
        %p644 = scmp.lt.s32.totalorder %s28, 1
        %s645 = scalar_select %p644, %s28, 1
        %s646 = smul.addr %s645, 2
        %s647 = smul.addr %s646, 4
        %s648 = scalar_lea.vmem %s6, %s647
        %p649 = scmp.lt.s32.totalorder %s28, 1
        %s650 = scalar_select %p649, %s28, 1
        %s651 = scalar_lea.vmem %s7, %s650
        %p652 = scmp.lt.s32.totalorder %s28, 1
        %s653 = scalar_select %p652, %s28, 1
        %s654 = scalar_lea.vmem %s8, %s653
        %p655 = scmp.lt.s32.totalorder %s28, 1
        %s656 = scalar_select %p655, %s28, 1
        %s657 = scalar_lea.vmem %s9, %s656
        %p658 = scmp.lt.s32.totalorder %s28, 1
        %s659 = scalar_select %p658, %s28, 1
        %s660 = smul.addr %s659, 4
        %s661 = smul.addr %s660, 4
        %s662 = scalar_lea.vmem %s10, %s661
        %p663 = scmp.lt.s32.totalorder %s28, 1
        %s664 = scalar_select %p663, %s28, 1
        %s665 = scalar_lea.vmem %s11, %s664
        %p666 = scmp.lt.s32.totalorder %s28, 1
        %s667 = scalar_select %p666, %s28, 1
        %s668 = smul.addr %s667, 8
        %s669 = smul.addr %s668, 4
        %s670 = scalar_lea.vmem %s12, %s669
        %p671 = scmp.lt.s32.totalorder %s28, 1
        %s672 = scalar_select %p671, %s28, 1
        %s673 = scalar_lea.vmem %s13, %s672
        %p674 = scmp.lt.s32.totalorder %s28, 1
        %s675 = scalar_select %p674, %s28, 1
        %s676 = scalar_lea.vmem %s14, %s675
        %p677 = scmp.lt.s32.totalorder %s28, 1
        %s678 = scalar_select %p677, %s28, 1
        %s679 = scalar_lea.vmem %s15, %s678
        %p681 = scmp.eq.s32.totalorder %s28, 0
        // Predicated region
        $region85: #{_lambda_.1} parent=83 // pred_check
          %p682 = pneg %p681
        $region86: #{_lambda_.1} parent=83 // pred_check_branch
          %684 = sbr.rel (%p682) target = $region88
        $region87: #{_lambda_.1} parent=83 // pred_region
          %v685 = vld [vmem:[%s0] sm:$0xff]
          %v686 = vld [vmem:[%s0 + $0x8] sm:$0xff]
          %v687 = vld [vmem:[%s1] sm:$0xff]
          %v688 = vld [vmem:[%s1 + $0x8] sm:$0xff]
          %v689 = vadd.f32 %v685, %v687
          %v690 = vadd.f32 %v686, %v688
          %v691 = vpack.c.bf16 %v690, %v689
          %v692 = vld [vmem:[%s2] sm:$0xf]
          %v693 = vld [vmem:[%s2 + $0x4] sm:$0xf]
          %v694 = vld [vmem:[%s2 + $0x8] sm:$0xf]
          %v695 = vld [vmem:[%s2 + $0xc] sm:$0xf]
          %v696 = vld [vmem:[%s3] sm:$0x1]
          %v698 = vlaneseq
          %v699 = vshrl.u32 %v698, 7
          %v700 = vsub.s32 0, %v699
          %v701 = vrot.slane %v696, %v700
          %v707 = vunpack.c.l.b16 %v692
          %v708 = vunpack.c.l.b16 %v693
          %v709 = vunpack.c.l.b16 %v694
          %v710 = vunpack.c.l.b16 %v695
          %v711 = vpack.c.b16 %v708, %v707
          %v712 = vpack.c.b16 %v710, %v709
          %vm715 = vcmask 261120
          %v717 = vsel %vm715, %v691, 0
          %719 = vmatprep.subr.bf16.mxu0 0
          %720 = vmatpush1.bf16.msra.mxu0 %v711
          %721 = vmatprep.subr.bf16.mxu0 0
          %722 = vmatpush1.bf16.msra.mxu0 %v712
          %723 = vmatprep.subr.bf16.mxu0 0
          %724 = vmatpush1.bf16.msra.mxu0 0
          %725 = vmatprep.subr.bf16.mxu0 0
          %726 = vmatpush1.bf16.msra.mxu0 0
          %727 = vmatprep.subr.bf16.mxu0 0
          %728 = vmatpush1.bf16.msra.mxu0 0
          %729 = vmatprep.subr.bf16.mxu0 0
          %730 = vmatpush1.bf16.msra.mxu0 0
          %731 = vmatprep.subr.bf16.mxu0 0
          %732 = vmatpush1.bf16.msra.mxu0 0
          %733 = vmatprep.subr.bf16.mxu0 0
          %734 = vmatpush1.bf16.msra.mxu0 0
          %735 = vmatprep.subr.bf16.mxu0 0
          %736 = vmatpush1.bf16.msra.mxu0 0
          %737 = vmatprep.subr.bf16.mxu0 0
          %738 = vmatpush1.bf16.msra.mxu0 0
          %739 = vmatprep.subr.bf16.mxu0 0
          %740 = vmatpush1.bf16.msra.mxu0 0
          %741 = vmatprep.subr.bf16.mxu0 0
          %742 = vmatpush1.bf16.msra.mxu0 0
          %743 = vmatprep.subr.bf16.mxu0 0
          %744 = vmatpush1.bf16.msra.mxu0 0
          %745 = vmatprep.subr.bf16.mxu0 0
          %746 = vmatpush1.bf16.msra.mxu0 0
          %747 = vmatprep.subr.bf16.mxu0 0
          %748 = vmatpush1.bf16.msra.mxu0 0
          %749 = vmatprep.subr.bf16.mxu0 0
          %750 = vmatpush1.bf16.msra.mxu0 0
          %751 = vmatprep.mubr.bf16.mxu0 0
          %752 = vmatmul.mubr.bf16.gmra.mrb[0].mxu0 %v717
          %v753 = vpop.f32.mrb[0].mxu0
          %v754 = vadd.f32 %v701, %v753
          %v755 = vpop.f32.mrb[0].mxu0
          %v756 = vpop.f32.mrb[0].mxu0
          %v757 = vadd.f32 %v701, %v756
          %v758 = vpop.f32.mrb[0].mxu0
          %759 = vdwg.mxu0
          %760 = vst.msk [vmem:[#allocation2] sm:$0xff] %vm715, %v754
          %761 = vst.msk [vmem:[#allocation2 + $0x8] sm:$0xff] %vm715, %v757
        $region88: #{_lambda_.1} parent=83 // pred_fallthru
          _
        %v762 = vld [vmem:[#allocation2] sm:$0xff]
        %v763 = vld [vmem:[#allocation2 + $0x8] sm:$0xff]
        %v764 = vpack.c.bf16 %v763, %v762
        %v765 = vld [vmem:[%s640] sm:$0xf]
        %v766 = vld [vmem:[%s640 + $0x4] sm:$0xf]
        %v767 = vld [vmem:[%s640 + $0x8] sm:$0xf]
        %v768 = vld [vmem:[%s640 + $0xc] sm:$0xf]
        %v769 = vld [vmem:[%s643] sm:$0x1]
        %v771 = vlaneseq
        %v772 = vshrl.u32 %v771, 7
        %v773 = vsub.s32 0, %v772
        %v774 = vrot.slane %v769, %v773
        %v780 = vunpack.c.l.b16 %v765
        %v781 = vunpack.c.l.b16 %v766
        %v782 = vunpack.c.l.b16 %v767
        %v783 = vunpack.c.l.b16 %v768
        %v784 = vpack.c.b16 %v781, %v780
        %v785 = vpack.c.b16 %v783, %v782
        %vm788 = vcmask 261120
        %v790 = vsel %vm788, %v764, 0
        %792 = vmatprep.subr.bf16.mxu0 0
        %793 = vmatpush1.bf16.msra.mxu0 %v784
        %794 = vmatprep.subr.bf16.mxu0 0
        %795 = vmatpush1.bf16.msra.mxu0 %v785
        %796 = vmatprep.subr.bf16.mxu0 0
        %797 = vmatpush1.bf16.msra.mxu0 0
        %798 = vmatprep.subr.bf16.mxu0 0
        %799 = vmatpush1.bf16.msra.mxu0 0
        %800 = vmatprep.subr.bf16.mxu0 0
        %801 = vmatpush1.bf16.msra.mxu0 0
        %802 = vmatprep.subr.bf16.mxu0 0
        %803 = vmatpush1.bf16.msra.mxu0 0
        %804 = vmatprep.subr.bf16.mxu0 0
        %805 = vmatpush1.bf16.msra.mxu0 0
        %806 = vmatprep.subr.bf16.mxu0 0
        %807 = vmatpush1.bf16.msra.mxu0 0
        %808 = vmatprep.subr.bf16.mxu0 0
        %809 = vmatpush1.bf16.msra.mxu0 0
        %810 = vmatprep.subr.bf16.mxu0 0
        %811 = vmatpush1.bf16.msra.mxu0 0
        %812 = vmatprep.subr.bf16.mxu0 0
        %813 = vmatpush1.bf16.msra.mxu0 0
        %814 = vmatprep.subr.bf16.mxu0 0
        %815 = vmatpush1.bf16.msra.mxu0 0
        %816 = vmatprep.subr.bf16.mxu0 0
        %817 = vmatpush1.bf16.msra.mxu0 0
        %818 = vmatprep.subr.bf16.mxu0 0
        %819 = vmatpush1.bf16.msra.mxu0 0
        %820 = vmatprep.subr.bf16.mxu0 0
        %821 = vmatpush1.bf16.msra.mxu0 0
        %822 = vmatprep.subr.bf16.mxu0 0
        %823 = vmatpush1.bf16.msra.mxu0 0
        %824 = vmatprep.mubr.bf16.mxu0 0
        %825 = vmatmul.mubr.bf16.gmra.mrb[0].mxu0 %v790
        %v826 = vpop.f32.mrb[0].mxu0
        %v827 = vadd.f32 %v774, %v826
        %v828 = vpop.f32.mrb[0].mxu0
        %v829 = vpop.f32.mrb[0].mxu0
        %v830 = vadd.f32 %v774, %v829
        %v831 = vpop.f32.mrb[0].mxu0
        %832 = vdwg.mxu0
        %v833 = vld [vmem:[%s648] sm:$0xf]
        %v834 = vld [vmem:[%s648 + $0x4] sm:$0xf]
        %836 = vrot.lane.b32.xlu0 %v827, 112
        %v837 = vpop.permute.xlu0 %836
        %vm838 = vcmask 64512
        %v839 = vsel %vm838, %v827, 0
        %v841 = vsel %vm838, %v837, 0
        %843 = vmatprep.subr.mxu0 0.0
        %844 = vmatpush1.xpose.msra.mxu0 %v841
        %845 = vmatprep.subr.mxu0 0.0
        %846 = vmatpush1.xpose.msra.mxu0 0.0
        %847 = vmatprep.subr.mxu0 0.0
        %848 = vmatpush1.xpose.msra.mxu0 0.0
        %849 = vmatprep.subr.mxu0 0.0
        %850 = vmatpush1.xpose.msra.mxu0 0.0
        %851 = vmatprep.subr.mxu0 0.0
        %852 = vmatpush1.xpose.msra.mxu0 0.0
        %853 = vmatprep.subr.mxu0 0.0
        %854 = vmatpush1.xpose.msra.mxu0 0.0
        %855 = vmatprep.subr.mxu0 0.0
        %856 = vmatpush1.xpose.msra.mxu0 0.0
        %857 = vmatprep.subr.mxu0 0.0
        %858 = vmatpush1.xpose.msra.mxu0 0.0
        %859 = vmatprep.subr.mxu0 0.0
        %860 = vmatpush1.xpose.msra.mxu0 0.0
        %861 = vmatprep.subr.mxu0 0.0
        %862 = vmatpush1.xpose.msra.mxu0 0.0
        %863 = vmatprep.subr.mxu0 0.0
        %864 = vmatpush1.xpose.msra.mxu0 0.0
        %865 = vmatprep.subr.mxu0 0.0
        %866 = vmatpush1.xpose.msra.mxu0 0.0
        %867 = vmatprep.subr.mxu0 0.0
        %868 = vmatpush1.xpose.msra.mxu0 0.0
        %869 = vmatprep.subr.mxu0 0.0
        %870 = vmatpush1.xpose.msra.mxu0 0.0
        %871 = vmatprep.subr.mxu0 0.0
        %872 = vmatpush1.xpose.msra.mxu0 0.0
        %873 = vmatprep.subr.mxu0 0.0
        %874 = vmatpush1.xpose.msra.mxu0 0.0
        %875 = vmatprep.subr.mxu0 0.0
        %876 = vmatpush1.xpose.msra.mxu0 0.0
        %877 = vmatprep.subr.mxu0 0.0
        %878 = vmatpush1.xpose.msra.mxu0 0.0
        %879 = vmatprep.subr.mxu0 0.0
        %880 = vmatpush1.xpose.msra.mxu0 0.0
        %881 = vmatprep.subr.mxu0 0.0
        %882 = vmatpush1.xpose.msra.mxu0 0.0
        %883 = vmatprep.subr.mxu0 0.0
        %884 = vmatpush1.xpose.msra.mxu0 0.0
        %885 = vmatprep.subr.mxu0 0.0
        %886 = vmatpush1.xpose.msra.mxu0 0.0
        %887 = vmatprep.subr.mxu0 0.0
        %888 = vmatpush1.xpose.msra.mxu0 0.0
        %889 = vmatprep.subr.mxu0 0.0
        %890 = vmatpush1.xpose.msra.mxu0 0.0
        %891 = vmatprep.subr.mxu0 0.0
        %892 = vmatpush1.xpose.msra.mxu0 0.0
        %893 = vmatprep.subr.mxu0 0.0
        %894 = vmatpush1.xpose.msra.mxu0 0.0
        %895 = vmatprep.subr.mxu0 0.0
        %896 = vmatpush1.xpose.msra.mxu0 0.0
        %897 = vmatprep.subr.mxu0 0.0
        %898 = vmatpush1.xpose.msra.mxu0 0.0
        %899 = vmatprep.subr.mxu0 0.0
        %900 = vmatpush1.xpose.msra.mxu0 0.0
        %901 = vmatprep.subr.mxu0 0.0
        %902 = vmatpush1.xpose.msra.mxu0 0.0
        %903 = vmatprep.subr.mxu0 0.0
        %904 = vmatpush1.xpose.msra.mxu0 0.0
        %905 = vmatprep.subr.mxu0 0.0
        %906 = vmatpush1.xpose.msra.mxu0 0.0
        %907 = vmatprep.mubr.f32.mxu0 0.0
        %908 = vmatmul.mubr.f32.gmra.mrb[0].mxu0 %v839
        %v909 = vpop.f32.mrb[0].mxu0
        %v910 = vadd.f32 0.0, %v909
        %v911 = vpop.f32.mrb[0].mxu0
        %912 = vdwg.mxu0
        %914 = vrot.lane.b32.xlu0 %v830, 112
        %v915 = vpop.permute.xlu0 %914
        %v916 = vsel %vm838, %v830, 0
        %v918 = vsel %vm838, %v915, 0
        %920 = vmatprep.subr.mxu0 0.0
        %921 = vmatpush1.xpose.msra.mxu0 %v918
        %922 = vmatprep.subr.mxu0 0.0
        %923 = vmatpush1.xpose.msra.mxu0 0.0
        %924 = vmatprep.subr.mxu0 0.0
        %925 = vmatpush1.xpose.msra.mxu0 0.0
        %926 = vmatprep.subr.mxu0 0.0
        %927 = vmatpush1.xpose.msra.mxu0 0.0
        %928 = vmatprep.subr.mxu0 0.0
        %929 = vmatpush1.xpose.msra.mxu0 0.0
        %930 = vmatprep.subr.mxu0 0.0
        %931 = vmatpush1.xpose.msra.mxu0 0.0
        %932 = vmatprep.subr.mxu0 0.0
        %933 = vmatpush1.xpose.msra.mxu0 0.0
        %934 = vmatprep.subr.mxu0 0.0
        %935 = vmatpush1.xpose.msra.mxu0 0.0
        %936 = vmatprep.subr.mxu0 0.0
        %937 = vmatpush1.xpose.msra.mxu0 0.0
        %938 = vmatprep.subr.mxu0 0.0
        %939 = vmatpush1.xpose.msra.mxu0 0.0
        %940 = vmatprep.subr.mxu0 0.0
        %941 = vmatpush1.xpose.msra.mxu0 0.0
        %942 = vmatprep.subr.mxu0 0.0
        %943 = vmatpush1.xpose.msra.mxu0 0.0
        %944 = vmatprep.subr.mxu0 0.0
        %945 = vmatpush1.xpose.msra.mxu0 0.0
        %946 = vmatprep.subr.mxu0 0.0
        %947 = vmatpush1.xpose.msra.mxu0 0.0
        %948 = vmatprep.subr.mxu0 0.0
        %949 = vmatpush1.xpose.msra.mxu0 0.0
        %950 = vmatprep.subr.mxu0 0.0
        %951 = vmatpush1.xpose.msra.mxu0 0.0
        %952 = vmatprep.subr.mxu0 0.0
        %953 = vmatpush1.xpose.msra.mxu0 0.0
        %954 = vmatprep.subr.mxu0 0.0
        %955 = vmatpush1.xpose.msra.mxu0 0.0
        %956 = vmatprep.subr.mxu0 0.0
        %957 = vmatpush1.xpose.msra.mxu0 0.0
        %958 = vmatprep.subr.mxu0 0.0
        %959 = vmatpush1.xpose.msra.mxu0 0.0
        %960 = vmatprep.subr.mxu0 0.0
        %961 = vmatpush1.xpose.msra.mxu0 0.0
        %962 = vmatprep.subr.mxu0 0.0
        %963 = vmatpush1.xpose.msra.mxu0 0.0
        %964 = vmatprep.subr.mxu0 0.0
        %965 = vmatpush1.xpose.msra.mxu0 0.0
        %966 = vmatprep.subr.mxu0 0.0
        %967 = vmatpush1.xpose.msra.mxu0 0.0
        %968 = vmatprep.subr.mxu0 0.0
        %969 = vmatpush1.xpose.msra.mxu0 0.0
        %970 = vmatprep.subr.mxu0 0.0
        %971 = vmatpush1.xpose.msra.mxu0 0.0
        %972 = vmatprep.subr.mxu0 0.0
        %973 = vmatpush1.xpose.msra.mxu0 0.0
        %974 = vmatprep.subr.mxu0 0.0
        %975 = vmatpush1.xpose.msra.mxu0 0.0
        %976 = vmatprep.subr.mxu0 0.0
        %977 = vmatpush1.xpose.msra.mxu0 0.0
        %978 = vmatprep.subr.mxu0 0.0
        %979 = vmatpush1.xpose.msra.mxu0 0.0
        %980 = vmatprep.subr.mxu0 0.0
        %981 = vmatpush1.xpose.msra.mxu0 0.0
        %982 = vmatprep.subr.mxu0 0.0
        %983 = vmatpush1.xpose.msra.mxu0 0.0
        %984 = vmatprep.mubr.f32.mxu0 0.0
        %985 = vmatmul.mubr.f32.gmra.mrb[0].mxu0 %v916
        %v986 = vpop.f32.mrb[0].mxu0
        %v987 = vadd.f32 0.0, %v986
        %v988 = vpop.f32.mrb[0].mxu0
        %989 = vdwg.mxu0
        %v990 = vmul.f32 %v910, 0.35355338
        %v991 = vmul.f32 %v987, 0.35355338
        %v992 = vsel %vm838, %v990, -inf
        %993 = vmax.xlane.f32.xlu0 %v992
        %v994 = vpop.xlane.xlu0 %993
        %v995 = vsel %vm838, %v991, -inf
        %996 = vmax.xlane.f32.xlu0 %v995
        %v997 = vpop.xlane.xlu0 %996
        %v998 = vsub.f32 %v990, %v994
        %v999 = vsub.f32 %v991, %v997
        %v1000 = vmul.f32 %v998, 1.442695
        %v1001 = vpow.pop %v1000
        %v1002 = vmul.f32 %v999, 1.442695
        %v1003 = vpow.pop %v1002
        %v1004 = vsel %vm838, %v1001, 0.0
        %1005 = vadd.xlane.f32.xlu0 %v1004
        %v1006 = vpop.xlane.xlu0 %1005
        %v1007 = vsel %vm838, %v1003, 0.0
        %1008 = vadd.xlane.f32.xlu0 %v1007
        %v1009 = vpop.xlane.xlu0 %1008
        %v1010 = vrcp.pop %v1006
        %v1011 = vrcp.pop %v1009
        %v1012 = vmul.f32 %v1001, %v1010
        %v1013 = vmul.f32 %v1003, %v1011
        %1014 = vrot.lane.b32.xlu0 %v827, 96
        %v1015 = vpop.permute.xlu0 %1014
        %v1018 = vsel %vm838, %v1012, 0
        %1020 = vmatprep.subr.mxu0 0.0
        %1021 = vmatpush1.msra.mxu0 %v1015
        %1022 = vmatprep.subr.mxu0 0.0
        %1023 = vmatpush1.msra.mxu0 0.0
        %1024 = vmatprep.subr.mxu0 0.0
        %1025 = vmatpush1.msra.mxu0 0.0
        %1026 = vmatprep.subr.mxu0 0.0
        %1027 = vmatpush1.msra.mxu0 0.0
        %1028 = vmatprep.subr.mxu0 0.0
        %1029 = vmatpush1.msra.mxu0 0.0
        %1030 = vmatprep.subr.mxu0 0.0
        %1031 = vmatpush1.msra.mxu0 0.0
        %1032 = vmatprep.subr.mxu0 0.0
        %1033 = vmatpush1.msra.mxu0 0.0
        %1034 = vmatprep.subr.mxu0 0.0
        %1035 = vmatpush1.msra.mxu0 0.0
        %1036 = vmatprep.subr.mxu0 0.0
        %1037 = vmatpush1.msra.mxu0 0.0
        %1038 = vmatprep.subr.mxu0 0.0
        %1039 = vmatpush1.msra.mxu0 0.0
        %1040 = vmatprep.subr.mxu0 0.0
        %1041 = vmatpush1.msra.mxu0 0.0
        %1042 = vmatprep.subr.mxu0 0.0
        %1043 = vmatpush1.msra.mxu0 0.0
        %1044 = vmatprep.subr.mxu0 0.0
        %1045 = vmatpush1.msra.mxu0 0.0
        %1046 = vmatprep.subr.mxu0 0.0
        %1047 = vmatpush1.msra.mxu0 0.0
        %1048 = vmatprep.subr.mxu0 0.0
        %1049 = vmatpush1.msra.mxu0 0.0
        %1050 = vmatprep.subr.mxu0 0.0
        %1051 = vmatpush1.msra.mxu0 0.0
        %1052 = vmatprep.subr.mxu0 0.0
        %1053 = vmatpush1.msra.mxu0 0.0
        %1054 = vmatprep.subr.mxu0 0.0
        %1055 = vmatpush1.msra.mxu0 0.0
        %1056 = vmatprep.subr.mxu0 0.0
        %1057 = vmatpush1.msra.mxu0 0.0
        %1058 = vmatprep.subr.mxu0 0.0
        %1059 = vmatpush1.msra.mxu0 0.0
        %1060 = vmatprep.subr.mxu0 0.0
        %1061 = vmatpush1.msra.mxu0 0.0
        %1062 = vmatprep.subr.mxu0 0.0
        %1063 = vmatpush1.msra.mxu0 0.0
        %1064 = vmatprep.subr.mxu0 0.0
        %1065 = vmatpush1.msra.mxu0 0.0
        %1066 = vmatprep.subr.mxu0 0.0
        %1067 = vmatpush1.msra.mxu0 0.0
        %1068 = vmatprep.subr.mxu0 0.0
        %1069 = vmatpush1.msra.mxu0 0.0
        %1070 = vmatprep.subr.mxu0 0.0
        %1071 = vmatpush1.msra.mxu0 0.0
        %1072 = vmatprep.subr.mxu0 0.0
        %1073 = vmatpush1.msra.mxu0 0.0
        %1074 = vmatprep.subr.mxu0 0.0
        %1075 = vmatpush1.msra.mxu0 0.0
        %1076 = vmatprep.subr.mxu0 0.0
        %1077 = vmatpush1.msra.mxu0 0.0
        %1078 = vmatprep.subr.mxu0 0.0
        %1079 = vmatpush1.msra.mxu0 0.0
        %1080 = vmatprep.subr.mxu0 0.0
        %1081 = vmatpush1.msra.mxu0 0.0
        %1082 = vmatprep.subr.mxu0 0.0
        %1083 = vmatpush1.msra.mxu0 0.0
        %1084 = vmatprep.mubr.f32.mxu0 0.0
        %1085 = vmatmul.mubr.f32.gmra.mrb[0].mxu0 %v1018
        %v1086 = vpop.f32.mrb[0].mxu0
        %v1087 = vadd.f32 0.0, %v1086
        %v1088 = vpop.f32.mrb[0].mxu0
        %1089 = vdwg.mxu0
        %1090 = vrot.lane.b32.xlu0 %v830, 96
        %v1091 = vpop.permute.xlu0 %1090
        %v1094 = vsel %vm838, %v1013, 0
        %1096 = vmatprep.subr.mxu0 0.0
        %1097 = vmatpush1.msra.mxu0 %v1091
        %1098 = vmatprep.subr.mxu0 0.0
        %1099 = vmatpush1.msra.mxu0 0.0
        %1100 = vmatprep.subr.mxu0 0.0
        %1101 = vmatpush1.msra.mxu0 0.0
        %1102 = vmatprep.subr.mxu0 0.0
        %1103 = vmatpush1.msra.mxu0 0.0
        %1104 = vmatprep.subr.mxu0 0.0
        %1105 = vmatpush1.msra.mxu0 0.0
        %1106 = vmatprep.subr.mxu0 0.0
        %1107 = vmatpush1.msra.mxu0 0.0
        %1108 = vmatprep.subr.mxu0 0.0
        %1109 = vmatpush1.msra.mxu0 0.0
        %1110 = vmatprep.subr.mxu0 0.0
        %1111 = vmatpush1.msra.mxu0 0.0
        %1112 = vmatprep.subr.mxu0 0.0
        %1113 = vmatpush1.msra.mxu0 0.0
        %1114 = vmatprep.subr.mxu0 0.0
        %1115 = vmatpush1.msra.mxu0 0.0
        %1116 = vmatprep.subr.mxu0 0.0
        %1117 = vmatpush1.msra.mxu0 0.0
        %1118 = vmatprep.subr.mxu0 0.0
        %1119 = vmatpush1.msra.mxu0 0.0
        %1120 = vmatprep.subr.mxu0 0.0
        %1121 = vmatpush1.msra.mxu0 0.0
        %1122 = vmatprep.subr.mxu0 0.0
        %1123 = vmatpush1.msra.mxu0 0.0
        %1124 = vmatprep.subr.mxu0 0.0
        %1125 = vmatpush1.msra.mxu0 0.0
        %1126 = vmatprep.subr.mxu0 0.0
        %1127 = vmatpush1.msra.mxu0 0.0
        %1128 = vmatprep.subr.mxu0 0.0
        %1129 = vmatpush1.msra.mxu0 0.0
        %1130 = vmatprep.subr.mxu0 0.0
        %1131 = vmatpush1.msra.mxu0 0.0
        %1132 = vmatprep.subr.mxu0 0.0
        %1133 = vmatpush1.msra.mxu0 0.0
        %1134 = vmatprep.subr.mxu0 0.0
        %1135 = vmatpush1.msra.mxu0 0.0
        %1136 = vmatprep.subr.mxu0 0.0
        %1137 = vmatpush1.msra.mxu0 0.0
        %1138 = vmatprep.subr.mxu0 0.0
        %1139 = vmatpush1.msra.mxu0 0.0
        %1140 = vmatprep.subr.mxu0 0.0
        %1141 = vmatpush1.msra.mxu0 0.0
        %1142 = vmatprep.subr.mxu0 0.0
        %1143 = vmatpush1.msra.mxu0 0.0
        %1144 = vmatprep.subr.mxu0 0.0
        %1145 = vmatpush1.msra.mxu0 0.0
        %1146 = vmatprep.subr.mxu0 0.0
        %1147 = vmatpush1.msra.mxu0 0.0
        %1148 = vmatprep.subr.mxu0 0.0
        %1149 = vmatpush1.msra.mxu0 0.0
        %1150 = vmatprep.subr.mxu0 0.0
        %1151 = vmatpush1.msra.mxu0 0.0
        %1152 = vmatprep.subr.mxu0 0.0
        %1153 = vmatpush1.msra.mxu0 0.0
        %1154 = vmatprep.subr.mxu0 0.0
        %1155 = vmatpush1.msra.mxu0 0.0
        %1156 = vmatprep.subr.mxu0 0.0
        %1157 = vmatpush1.msra.mxu0 0.0
        %1158 = vmatprep.subr.mxu0 0.0
        %1159 = vmatpush1.msra.mxu0 0.0
        %1160 = vmatprep.mubr.f32.mxu0 0.0
        %1161 = vmatmul.mubr.f32.gmra.mrb[0].mxu0 %v1094
        %v1162 = vpop.f32.mrb[0].mxu0
        %v1163 = vadd.f32 0.0, %v1162
        %v1164 = vpop.f32.mrb[0].mxu0
        %1165 = vdwg.mxu0
        %v1166 = vpack.c.bf16 %v1163, %v1087
        %1167 = vrot.lane.b32.xlu0 %v827, 120
        %v1168 = vpop.permute.xlu0 %1167
        %1169 = vrot.lane.b32.xlu0 %v827, 104
        %v1170 = vpop.permute.xlu0 %1169
        %v1171 = vsel %vm838, %v1168, 0
        %v1173 = vsel %vm838, %v1170, 0
        %1175 = vmatprep.subr.mxu0 0.0
        %1176 = vmatpush1.xpose.msra.mxu0 %v1173
        %1177 = vmatprep.subr.mxu0 0.0
        %1178 = vmatpush1.xpose.msra.mxu0 0.0
        %1179 = vmatprep.subr.mxu0 0.0
        %1180 = vmatpush1.xpose.msra.mxu0 0.0
        %1181 = vmatprep.subr.mxu0 0.0
        %1182 = vmatpush1.xpose.msra.mxu0 0.0
        %1183 = vmatprep.subr.mxu0 0.0
        %1184 = vmatpush1.xpose.msra.mxu0 0.0
        %1185 = vmatprep.subr.mxu0 0.0
        %1186 = vmatpush1.xpose.msra.mxu0 0.0
        %1187 = vmatprep.subr.mxu0 0.0
        %1188 = vmatpush1.xpose.msra.mxu0 0.0
        %1189 = vmatprep.subr.mxu0 0.0
        %1190 = vmatpush1.xpose.msra.mxu0 0.0
        %1191 = vmatprep.subr.mxu0 0.0
        %1192 = vmatpush1.xpose.msra.mxu0 0.0
        %1193 = vmatprep.subr.mxu0 0.0
        %1194 = vmatpush1.xpose.msra.mxu0 0.0
        %1195 = vmatprep.subr.mxu0 0.0
        %1196 = vmatpush1.xpose.msra.mxu0 0.0
        %1197 = vmatprep.subr.mxu0 0.0
        %1198 = vmatpush1.xpose.msra.mxu0 0.0
        %1199 = vmatprep.subr.mxu0 0.0
        %1200 = vmatpush1.xpose.msra.mxu0 0.0
        %1201 = vmatprep.subr.mxu0 0.0
        %1202 = vmatpush1.xpose.msra.mxu0 0.0
        %1203 = vmatprep.subr.mxu0 0.0
        %1204 = vmatpush1.xpose.msra.mxu0 0.0
        %1205 = vmatprep.subr.mxu0 0.0
        %1206 = vmatpush1.xpose.msra.mxu0 0.0
        %1207 = vmatprep.subr.mxu0 0.0
        %1208 = vmatpush1.xpose.msra.mxu0 0.0
        %1209 = vmatprep.subr.mxu0 0.0
        %1210 = vmatpush1.xpose.msra.mxu0 0.0
        %1211 = vmatprep.subr.mxu0 0.0
        %1212 = vmatpush1.xpose.msra.mxu0 0.0
        %1213 = vmatprep.subr.mxu0 0.0
        %1214 = vmatpush1.xpose.msra.mxu0 0.0
        %1215 = vmatprep.subr.mxu0 0.0
        %1216 = vmatpush1.xpose.msra.mxu0 0.0
        %1217 = vmatprep.subr.mxu0 0.0
        %1218 = vmatpush1.xpose.msra.mxu0 0.0
        %1219 = vmatprep.subr.mxu0 0.0
        %1220 = vmatpush1.xpose.msra.mxu0 0.0
        %1221 = vmatprep.subr.mxu0 0.0
        %1222 = vmatpush1.xpose.msra.mxu0 0.0
        %1223 = vmatprep.subr.mxu0 0.0
        %1224 = vmatpush1.xpose.msra.mxu0 0.0
        %1225 = vmatprep.subr.mxu0 0.0
        %1226 = vmatpush1.xpose.msra.mxu0 0.0
        %1227 = vmatprep.subr.mxu0 0.0
        %1228 = vmatpush1.xpose.msra.mxu0 0.0
        %1229 = vmatprep.subr.mxu0 0.0
        %1230 = vmatpush1.xpose.msra.mxu0 0.0
        %1231 = vmatprep.subr.mxu0 0.0
        %1232 = vmatpush1.xpose.msra.mxu0 0.0
        %1233 = vmatprep.subr.mxu0 0.0
        %1234 = vmatpush1.xpose.msra.mxu0 0.0
        %1235 = vmatprep.subr.mxu0 0.0
        %1236 = vmatpush1.xpose.msra.mxu0 0.0
        %1237 = vmatprep.subr.mxu0 0.0
        %1238 = vmatpush1.xpose.msra.mxu0 0.0
        %1239 = vmatprep.mubr.f32.mxu0 0.0
        %1240 = vmatmul.mubr.f32.gmra.mrb[0].mxu0 %v1171
        %v1241 = vpop.f32.mrb[0].mxu0
        %v1242 = vadd.f32 0.0, %v1241
        %v1243 = vpop.f32.mrb[0].mxu0
        %1244 = vdwg.mxu0
        %1245 = vrot.lane.b32.xlu0 %v830, 120
        %v1246 = vpop.permute.xlu0 %1245
        %1247 = vrot.lane.b32.xlu0 %v830, 104
        %v1248 = vpop.permute.xlu0 %1247
        %v1249 = vsel %vm838, %v1246, 0
        %v1251 = vsel %vm838, %v1248, 0
        %1253 = vmatprep.subr.mxu0 0.0
        %1254 = vmatpush1.xpose.msra.mxu0 %v1251
        %1255 = vmatprep.subr.mxu0 0.0
        %1256 = vmatpush1.xpose.msra.mxu0 0.0
        %1257 = vmatprep.subr.mxu0 0.0
        %1258 = vmatpush1.xpose.msra.mxu0 0.0
        %1259 = vmatprep.subr.mxu0 0.0
        %1260 = vmatpush1.xpose.msra.mxu0 0.0
        %1261 = vmatprep.subr.mxu0 0.0
        %1262 = vmatpush1.xpose.msra.mxu0 0.0
        %1263 = vmatprep.subr.mxu0 0.0
        %1264 = vmatpush1.xpose.msra.mxu0 0.0
        %1265 = vmatprep.subr.mxu0 0.0
        %1266 = vmatpush1.xpose.msra.mxu0 0.0
        %1267 = vmatprep.subr.mxu0 0.0
        %1268 = vmatpush1.xpose.msra.mxu0 0.0
        %1269 = vmatprep.subr.mxu0 0.0
        %1270 = vmatpush1.xpose.msra.mxu0 0.0
        %1271 = vmatprep.subr.mxu0 0.0
        %1272 = vmatpush1.xpose.msra.mxu0 0.0
        %1273 = vmatprep.subr.mxu0 0.0
        %1274 = vmatpush1.xpose.msra.mxu0 0.0
        %1275 = vmatprep.subr.mxu0 0.0
        %1276 = vmatpush1.xpose.msra.mxu0 0.0
        %1277 = vmatprep.subr.mxu0 0.0
        %1278 = vmatpush1.xpose.msra.mxu0 0.0
        %1279 = vmatprep.subr.mxu0 0.0
        %1280 = vmatpush1.xpose.msra.mxu0 0.0
        %1281 = vmatprep.subr.mxu0 0.0
        %1282 = vmatpush1.xpose.msra.mxu0 0.0
        %1283 = vmatprep.subr.mxu0 0.0
        %1284 = vmatpush1.xpose.msra.mxu0 0.0
        %1285 = vmatprep.subr.mxu0 0.0
        %1286 = vmatpush1.xpose.msra.mxu0 0.0
        %1287 = vmatprep.subr.mxu0 0.0
        %1288 = vmatpush1.xpose.msra.mxu0 0.0
        %1289 = vmatprep.subr.mxu0 0.0
        %1290 = vmatpush1.xpose.msra.mxu0 0.0
        %1291 = vmatprep.subr.mxu0 0.0
        %1292 = vmatpush1.xpose.msra.mxu0 0.0
        %1293 = vmatprep.subr.mxu0 0.0
        %1294 = vmatpush1.xpose.msra.mxu0 0.0
        %1295 = vmatprep.subr.mxu0 0.0
        %1296 = vmatpush1.xpose.msra.mxu0 0.0
        %1297 = vmatprep.subr.mxu0 0.0
        %1298 = vmatpush1.xpose.msra.mxu0 0.0
        %1299 = vmatprep.subr.mxu0 0.0
        %1300 = vmatpush1.xpose.msra.mxu0 0.0
        %1301 = vmatprep.subr.mxu0 0.0
        %1302 = vmatpush1.xpose.msra.mxu0 0.0
        %1303 = vmatprep.subr.mxu0 0.0
        %1304 = vmatpush1.xpose.msra.mxu0 0.0
        %1305 = vmatprep.subr.mxu0 0.0
        %1306 = vmatpush1.xpose.msra.mxu0 0.0
        %1307 = vmatprep.subr.mxu0 0.0
        %1308 = vmatpush1.xpose.msra.mxu0 0.0
        %1309 = vmatprep.subr.mxu0 0.0
        %1310 = vmatpush1.xpose.msra.mxu0 0.0
        %1311 = vmatprep.subr.mxu0 0.0
        %1312 = vmatpush1.xpose.msra.mxu0 0.0
        %1313 = vmatprep.subr.mxu0 0.0
        %1314 = vmatpush1.xpose.msra.mxu0 0.0
        %1315 = vmatprep.subr.mxu0 0.0
        %1316 = vmatpush1.xpose.msra.mxu0 0.0
        %1317 = vmatprep.mubr.f32.mxu0 0.0
        %1318 = vmatmul.mubr.f32.gmra.mrb[0].mxu0 %v1249
        %v1319 = vpop.f32.mrb[0].mxu0
        %v1320 = vadd.f32 0.0, %v1319
        %v1321 = vpop.f32.mrb[0].mxu0
        %1322 = vdwg.mxu0
        %v1323 = vmul.f32 %v1242, 0.35355338
        %v1324 = vmul.f32 %v1320, 0.35355338
        %v1325 = vsel %vm838, %v1323, -inf
        %1326 = vmax.xlane.f32.xlu0 %v1325
        %v1327 = vpop.xlane.xlu0 %1326
        %v1328 = vsel %vm838, %v1324, -inf
        %1329 = vmax.xlane.f32.xlu0 %v1328
        %v1330 = vpop.xlane.xlu0 %1329
        %v1331 = vsub.f32 %v1323, %v1327
        %v1332 = vsub.f32 %v1324, %v1330
        %v1333 = vmul.f32 %v1331, 1.442695
        %v1334 = vpow.pop %v1333
        %v1335 = vmul.f32 %v1332, 1.442695
        %v1336 = vpow.pop %v1335
        %v1337 = vsel %vm838, %v1334, 0.0
        %1338 = vadd.xlane.f32.xlu0 %v1337
        %v1339 = vpop.xlane.xlu0 %1338
        %v1340 = vsel %vm838, %v1336, 0.0
        %1341 = vadd.xlane.f32.xlu0 %v1340
        %v1342 = vpop.xlane.xlu0 %1341
        %v1343 = vrcp.pop %v1339
        %v1344 = vrcp.pop %v1342
        %v1345 = vmul.f32 %v1334, %v1343
        %v1346 = vmul.f32 %v1336, %v1344
        %1347 = vrot.lane.b32.xlu0 %v827, 88
        %v1348 = vpop.permute.xlu0 %1347
        %v1351 = vsel %vm838, %v1345, 0
        %1353 = vmatprep.subr.mxu0 0.0
        %1354 = vmatpush1.msra.mxu0 %v1348
        %1355 = vmatprep.subr.mxu0 0.0
        %1356 = vmatpush1.msra.mxu0 0.0
        %1357 = vmatprep.subr.mxu0 0.0
        %1358 = vmatpush1.msra.mxu0 0.0
        %1359 = vmatprep.subr.mxu0 0.0
        %1360 = vmatpush1.msra.mxu0 0.0
        %1361 = vmatprep.subr.mxu0 0.0
        %1362 = vmatpush1.msra.mxu0 0.0
        %1363 = vmatprep.subr.mxu0 0.0
        %1364 = vmatpush1.msra.mxu0 0.0
        %1365 = vmatprep.subr.mxu0 0.0
        %1366 = vmatpush1.msra.mxu0 0.0
        %1367 = vmatprep.subr.mxu0 0.0
        %1368 = vmatpush1.msra.mxu0 0.0
        %1369 = vmatprep.subr.mxu0 0.0
        %1370 = vmatpush1.msra.mxu0 0.0
        %1371 = vmatprep.subr.mxu0 0.0
        %1372 = vmatpush1.msra.mxu0 0.0
        %1373 = vmatprep.subr.mxu0 0.0
        %1374 = vmatpush1.msra.mxu0 0.0
        %1375 = vmatprep.subr.mxu0 0.0
        %1376 = vmatpush1.msra.mxu0 0.0
        %1377 = vmatprep.subr.mxu0 0.0
        %1378 = vmatpush1.msra.mxu0 0.0
        %1379 = vmatprep.subr.mxu0 0.0
        %1380 = vmatpush1.msra.mxu0 0.0
        %1381 = vmatprep.subr.mxu0 0.0
        %1382 = vmatpush1.msra.mxu0 0.0
        %1383 = vmatprep.subr.mxu0 0.0
        %1384 = vmatpush1.msra.mxu0 0.0
        %1385 = vmatprep.subr.mxu0 0.0
        %1386 = vmatpush1.msra.mxu0 0.0
        %1387 = vmatprep.subr.mxu0 0.0
        %1388 = vmatpush1.msra.mxu0 0.0
        %1389 = vmatprep.subr.mxu0 0.0
        %1390 = vmatpush1.msra.mxu0 0.0
        %1391 = vmatprep.subr.mxu0 0.0
        %1392 = vmatpush1.msra.mxu0 0.0
        %1393 = vmatprep.subr.mxu0 0.0
        %1394 = vmatpush1.msra.mxu0 0.0
        %1395 = vmatprep.subr.mxu0 0.0
        %1396 = vmatpush1.msra.mxu0 0.0
        %1397 = vmatprep.subr.mxu0 0.0
        %1398 = vmatpush1.msra.mxu0 0.0
        %1399 = vmatprep.subr.mxu0 0.0
        %1400 = vmatpush1.msra.mxu0 0.0
        %1401 = vmatprep.subr.mxu0 0.0
        %1402 = vmatpush1.msra.mxu0 0.0
        %1403 = vmatprep.subr.mxu0 0.0
        %1404 = vmatpush1.msra.mxu0 0.0
        %1405 = vmatprep.subr.mxu0 0.0
        %1406 = vmatpush1.msra.mxu0 0.0
        %1407 = vmatprep.subr.mxu0 0.0
        %1408 = vmatpush1.msra.mxu0 0.0
        %1409 = vmatprep.subr.mxu0 0.0
        %1410 = vmatpush1.msra.mxu0 0.0
        %1411 = vmatprep.subr.mxu0 0.0
        %1412 = vmatpush1.msra.mxu0 0.0
        %1413 = vmatprep.subr.mxu0 0.0
        %1414 = vmatpush1.msra.mxu0 0.0
        %1415 = vmatprep.subr.mxu0 0.0
        %1416 = vmatpush1.msra.mxu0 0.0
        %1417 = vmatprep.mubr.f32.mxu0 0.0
        %1418 = vmatmul.mubr.f32.gmra.mrb[0].mxu0 %v1351
        %v1419 = vpop.f32.mrb[0].mxu0
        %v1420 = vadd.f32 0.0, %v1419
        %v1421 = vpop.f32.mrb[0].mxu0
        %1422 = vdwg.mxu0
        %1423 = vrot.lane.b32.xlu0 %v830, 88
        %v1424 = vpop.permute.xlu0 %1423
        %v1427 = vsel %vm838, %v1346, 0
        %1429 = vmatprep.subr.mxu0 0.0
        %1430 = vmatpush1.msra.mxu0 %v1424
        %1431 = vmatprep.subr.mxu0 0.0
        %1432 = vmatpush1.msra.mxu0 0.0
        %1433 = vmatprep.subr.mxu0 0.0
        %1434 = vmatpush1.msra.mxu0 0.0
        %1435 = vmatprep.subr.mxu0 0.0
        %1436 = vmatpush1.msra.mxu0 0.0
        %1437 = vmatprep.subr.mxu0 0.0
        %1438 = vmatpush1.msra.mxu0 0.0
        %1439 = vmatprep.subr.mxu0 0.0
        %1440 = vmatpush1.msra.mxu0 0.0
        %1441 = vmatprep.subr.mxu0 0.0
        %1442 = vmatpush1.msra.mxu0 0.0
        %1443 = vmatprep.subr.mxu0 0.0
        %1444 = vmatpush1.msra.mxu0 0.0
        %1445 = vmatprep.subr.mxu0 0.0
        %1446 = vmatpush1.msra.mxu0 0.0
        %1447 = vmatprep.subr.mxu0 0.0
        %1448 = vmatpush1.msra.mxu0 0.0
        %1449 = vmatprep.subr.mxu0 0.0
        %1450 = vmatpush1.msra.mxu0 0.0
        %1451 = vmatprep.subr.mxu0 0.0
        %1452 = vmatpush1.msra.mxu0 0.0
        %1453 = vmatprep.subr.mxu0 0.0
        %1454 = vmatpush1.msra.mxu0 0.0
        %1455 = vmatprep.subr.mxu0 0.0
        %1456 = vmatpush1.msra.mxu0 0.0
        %1457 = vmatprep.subr.mxu0 0.0
        %1458 = vmatpush1.msra.mxu0 0.0
        %1459 = vmatprep.subr.mxu0 0.0
        %1460 = vmatpush1.msra.mxu0 0.0
        %1461 = vmatprep.subr.mxu0 0.0
        %1462 = vmatpush1.msra.mxu0 0.0
        %1463 = vmatprep.subr.mxu0 0.0
        %1464 = vmatpush1.msra.mxu0 0.0
        %1465 = vmatprep.subr.mxu0 0.0
        %1466 = vmatpush1.msra.mxu0 0.0
        %1467 = vmatprep.subr.mxu0 0.0
        %1468 = vmatpush1.msra.mxu0 0.0
        %1469 = vmatprep.subr.mxu0 0.0
        %1470 = vmatpush1.msra.mxu0 0.0
        %1471 = vmatprep.subr.mxu0 0.0
        %1472 = vmatpush1.msra.mxu0 0.0
        %1473 = vmatprep.subr.mxu0 0.0
        %1474 = vmatpush1.msra.mxu0 0.0
        %1475 = vmatprep.subr.mxu0 0.0
        %1476 = vmatpush1.msra.mxu0 0.0
        %1477 = vmatprep.subr.mxu0 0.0
        %1478 = vmatpush1.msra.mxu0 0.0
        %1479 = vmatprep.subr.mxu0 0.0
        %1480 = vmatpush1.msra.mxu0 0.0
        %1481 = vmatprep.subr.mxu0 0.0
        %1482 = vmatpush1.msra.mxu0 0.0
        %1483 = vmatprep.subr.mxu0 0.0
        %1484 = vmatpush1.msra.mxu0 0.0
        %1485 = vmatprep.subr.mxu0 0.0
        %1486 = vmatpush1.msra.mxu0 0.0
        %1487 = vmatprep.subr.mxu0 0.0
        %1488 = vmatpush1.msra.mxu0 0.0
        %1489 = vmatprep.subr.mxu0 0.0
        %1490 = vmatpush1.msra.mxu0 0.0
        %1491 = vmatprep.subr.mxu0 0.0
        %1492 = vmatpush1.msra.mxu0 0.0
        %1493 = vmatprep.mubr.f32.mxu0 0.0
        %1494 = vmatmul.mubr.f32.gmra.mrb[0].mxu0 %v1427
        %v1495 = vpop.f32.mrb[0].mxu0
        %v1496 = vadd.f32 0.0, %v1495
        %v1497 = vpop.f32.mrb[0].mxu0
        %1498 = vdwg.mxu0
        %v1499 = vpack.c.bf16 %v1496, %v1420
        %v1501 = vsel %vm838, %v1499, 0
        %vm1503 = vcmask 1043456
        %v1505 = vsel %vm1503, %v834, 0
        %1507 = vmatprep.subr.bf16.mxu0 0
        %1508 = vmatpush1.bf16.msra.mxu0 %v1505
        %1509 = vmatprep.subr.bf16.mxu0 0
        %1510 = vmatpush1.bf16.msra.mxu0 0
        %1511 = vmatprep.subr.bf16.mxu0 0
        %1512 = vmatpush1.bf16.msra.mxu0 0
        %1513 = vmatprep.subr.bf16.mxu0 0
        %1514 = vmatpush1.bf16.msra.mxu0 0
        %1515 = vmatprep.subr.bf16.mxu0 0
        %1516 = vmatpush1.bf16.msra.mxu0 0
        %1517 = vmatprep.subr.bf16.mxu0 0
        %1518 = vmatpush1.bf16.msra.mxu0 0
        %1519 = vmatprep.subr.bf16.mxu0 0
        %1520 = vmatpush1.bf16.msra.mxu0 0
        %1521 = vmatprep.subr.bf16.mxu0 0
        %1522 = vmatpush1.bf16.msra.mxu0 0
        %1523 = vmatprep.subr.bf16.mxu0 0
        %1524 = vmatpush1.bf16.msra.mxu0 0
        %1525 = vmatprep.subr.bf16.mxu0 0
        %1526 = vmatpush1.bf16.msra.mxu0 0
        %1527 = vmatprep.subr.bf16.mxu0 0
        %1528 = vmatpush1.bf16.msra.mxu0 0
        %1529 = vmatprep.subr.bf16.mxu0 0
        %1530 = vmatpush1.bf16.msra.mxu0 0
        %1531 = vmatprep.subr.bf16.mxu0 0
        %1532 = vmatpush1.bf16.msra.mxu0 0
        %1533 = vmatprep.subr.bf16.mxu0 0
        %1534 = vmatpush1.bf16.msra.mxu0 0
        %1535 = vmatprep.subr.bf16.mxu0 0
        %1536 = vmatpush1.bf16.msra.mxu0 0
        %1537 = vmatprep.subr.bf16.mxu0 0
        %1538 = vmatpush1.bf16.msra.mxu0 0
        %1539 = vmatprep.mubr.bf16.mxu0 0
        %1540 = vmatmul.mubr.bf16.gmra.mrb[0].mxu0 %v1501
        %v1541 = vpop.f32.mrb[0].mxu0
        %v1542 = vadd.f32 0.0, %v1541
        %v1543 = vpop.f32.mrb[0].mxu0
        %v1544 = vpop.f32.mrb[0].mxu0
        %v1545 = vadd.f32 0.0, %v1544
        %v1546 = vpop.f32.mrb[0].mxu0
        %1547 = vdwg.mxu0
        %v1549 = vsel %vm838, %v1166, 0
        %v1552 = vsel %vm1503, %v833, 0
        %1554 = vmatprep.subr.bf16.mxu0 0
        %1555 = vmatpush1.bf16.msra.mxu0 %v1552
        %1556 = vmatprep.subr.bf16.mxu0 0
        %1557 = vmatpush1.bf16.msra.mxu0 0
        %1558 = vmatprep.subr.bf16.mxu0 0
        %1559 = vmatpush1.bf16.msra.mxu0 0
        %1560 = vmatprep.subr.bf16.mxu0 0
        %1561 = vmatpush1.bf16.msra.mxu0 0
        %1562 = vmatprep.subr.bf16.mxu0 0
        %1563 = vmatpush1.bf16.msra.mxu0 0
        %1564 = vmatprep.subr.bf16.mxu0 0
        %1565 = vmatpush1.bf16.msra.mxu0 0
        %1566 = vmatprep.subr.bf16.mxu0 0
        %1567 = vmatpush1.bf16.msra.mxu0 0
        %1568 = vmatprep.subr.bf16.mxu0 0
        %1569 = vmatpush1.bf16.msra.mxu0 0
        %1570 = vmatprep.subr.bf16.mxu0 0
        %1571 = vmatpush1.bf16.msra.mxu0 0
        %1572 = vmatprep.subr.bf16.mxu0 0
        %1573 = vmatpush1.bf16.msra.mxu0 0
        %1574 = vmatprep.subr.bf16.mxu0 0
        %1575 = vmatpush1.bf16.msra.mxu0 0
        %1576 = vmatprep.subr.bf16.mxu0 0
        %1577 = vmatpush1.bf16.msra.mxu0 0
        %1578 = vmatprep.subr.bf16.mxu0 0
        %1579 = vmatpush1.bf16.msra.mxu0 0
        %1580 = vmatprep.subr.bf16.mxu0 0
        %1581 = vmatpush1.bf16.msra.mxu0 0
        %1582 = vmatprep.subr.bf16.mxu0 0
        %1583 = vmatpush1.bf16.msra.mxu0 0
        %1584 = vmatprep.subr.bf16.mxu0 0
        %1585 = vmatpush1.bf16.msra.mxu0 0
        %1586 = vmatprep.mubr.bf16.mxu0 0
        %1587 = vmatmul.mubr.bf16.gmra.mrb[0].mxu0 %v1549
        %v1588 = vpop.f32.mrb[0].mxu0
        %v1589 = vadd.f32 %v1542, %v1588
        %v1590 = vpop.f32.mrb[0].mxu0
        %v1591 = vpop.f32.mrb[0].mxu0
        %v1592 = vadd.f32 %v1545, %v1591
        %v1593 = vpop.f32.mrb[0].mxu0
        %1594 = vdwg.mxu0
        %v1595 = vld [vmem:[%s651] sm:$0x1]
        %v1597 = vlaneseq
        %v1598 = vshrl.u32 %v1597, 7
        %v1599 = vsub.s32 0, %v1598
        %v1600 = vrot.slane %v1595, %v1599
        %v1602 = vadd.f32 %v1589, %v1600
        %v1603 = vadd.f32 %v1592, %v1600
        %v1604 = vadd.f32 %v1602, %v762
        %v1605 = vadd.f32 %v1603, %v763
        %v1606 = vld [vmem:[%s654] sm:$0x1]
        %v1607 = vld [vmem:[%s657] sm:$0x1]
        %v1608 = vsel %vm788, %v1604, 0.0
        %1609 = vadd.xlane.f32.xlu0 %v1608
        %v1610 = vpop.xlane.xlu0 %1609
        %v1611 = vsel %vm788, %v1605, 0.0
        %1612 = vadd.xlane.f32.xlu0 %v1611
        %v1613 = vpop.xlane.xlu0 %1612
        %v1614 = vrcp.pop 32.0
        %v1615 = vmul.f32 %v1610, %v1614
        %v1616 = vmul.f32 %v1613, %v1614
        %v1617 = vmul.f32 %v1604, %v1604
        %v1618 = vmul.f32 %v1605, %v1605
        %v1619 = vsel %vm788, %v1617, 0.0
        %1620 = vadd.xlane.f32.xlu0 %v1619
        %v1621 = vpop.xlane.xlu0 %1620
        %v1622 = vsel %vm788, %v1618, 0.0
        %1623 = vadd.xlane.f32.xlu0 %v1622
        %v1624 = vpop.xlane.xlu0 %1623
        %v1625 = vmul.f32 %v1621, %v1614
        %v1626 = vmul.f32 %v1624, %v1614
        %v1627 = vmul.f32 %v1615, %v1615
        %v1628 = vmul.f32 %v1616, %v1616
        %v1629 = vsub.f32 %v1625, %v1627
        %v1630 = vsub.f32 %v1626, %v1628
        %v1631 = vsub.f32 %v1604, %v1615
        %v1632 = vsub.f32 %v1605, %v1616
        %v1633 = vadd.f32 %v1629, 1e-05
        %v1634 = vadd.f32 %v1630, 1e-05
        %v1635 = vrsqrt.pop %v1633
        %v1636 = vrsqrt.pop %v1634
        %v1637 = vmul.f32 %v1631, %v1635
        %v1638 = vmul.f32 %v1632, %v1636
        %v1640 = vlaneseq
        %v1641 = vshrl.u32 %v1640, 7
        %v1642 = vsub.s32 0, %v1641
        %v1643 = vrot.slane %v1606, %v1642
        %v1645 = vmul.f32 %v1637, %v1643
        %v1646 = vmul.f32 %v1638, %v1643
        %v1648 = vlaneseq
        %v1649 = vshrl.u32 %v1648, 7
        %v1650 = vsub.s32 0, %v1649
        %v1651 = vrot.slane %v1607, %v1650
        %v1653 = vadd.f32 %v1645, %v1651
        %v1654 = vadd.f32 %v1646, %v1651
        %v1655 = vpack.c.bf16 %v1654, %v1653
        %v1656 = vld [vmem:[%s662] sm:$0xf]
        %v1657 = vld [vmem:[%s662 + $0x4] sm:$0xf]
        %v1658 = vld [vmem:[%s662 + $0x8] sm:$0xf]
        %v1659 = vld [vmem:[%s662 + $0xc] sm:$0xf]
        %v1660 = vld [vmem:[%s665] sm:$0x1]
        %v1662 = vlaneseq
        %v1663 = vshrl.u32 %v1662, 7
        %v1664 = vsub.s32 0, %v1663
        %v1665 = vrot.slane %v1660, %v1664
        %v1671 = vunpack.c.l.b16 %v1656
        %v1672 = vunpack.c.l.b16 %v1657
        %v1673 = vunpack.c.l.b16 %v1658
        %v1674 = vunpack.c.l.b16 %v1659
        %v1675 = vpack.c.b16 %v1672, %v1671
        %v1676 = vpack.c.b16 %v1674, %v1673
        %v1680 = vsel %vm788, %v1655, 0
        %1682 = vmatprep.subr.bf16.mxu0 0
        %1683 = vmatpush1.bf16.msra.mxu0 %v1675
        %1684 = vmatprep.subr.bf16.mxu0 0
        %1685 = vmatpush1.bf16.msra.mxu0 %v1676
        %1686 = vmatprep.subr.bf16.mxu0 0
        %1687 = vmatpush1.bf16.msra.mxu0 0
        %1688 = vmatprep.subr.bf16.mxu0 0
        %1689 = vmatpush1.bf16.msra.mxu0 0
        %1690 = vmatprep.subr.bf16.mxu0 0
        %1691 = vmatpush1.bf16.msra.mxu0 0
        %1692 = vmatprep.subr.bf16.mxu0 0
        %1693 = vmatpush1.bf16.msra.mxu0 0
        %1694 = vmatprep.subr.bf16.mxu0 0
        %1695 = vmatpush1.bf16.msra.mxu0 0
        %1696 = vmatprep.subr.bf16.mxu0 0
        %1697 = vmatpush1.bf16.msra.mxu0 0
        %1698 = vmatprep.subr.bf16.mxu0 0
        %1699 = vmatpush1.bf16.msra.mxu0 0
        %1700 = vmatprep.subr.bf16.mxu0 0
        %1701 = vmatpush1.bf16.msra.mxu0 0
        %1702 = vmatprep.subr.bf16.mxu0 0
        %1703 = vmatpush1.bf16.msra.mxu0 0
        %1704 = vmatprep.subr.bf16.mxu0 0
        %1705 = vmatpush1.bf16.msra.mxu0 0
        %1706 = vmatprep.subr.bf16.mxu0 0
        %1707 = vmatpush1.bf16.msra.mxu0 0
        %1708 = vmatprep.subr.bf16.mxu0 0
        %1709 = vmatpush1.bf16.msra.mxu0 0
        %1710 = vmatprep.subr.bf16.mxu0 0
        %1711 = vmatpush1.bf16.msra.mxu0 0
        %1712 = vmatprep.subr.bf16.mxu0 0
        %1713 = vmatpush1.bf16.msra.mxu0 0
        %1714 = vmatprep.mubr.bf16.mxu0 0
        %1715 = vmatmul.mubr.bf16.gmra.mrb[0].mxu0 %v1680
        %v1716 = vpop.f32.mrb[0].mxu0
        %v1717 = vadd.f32 %v1665, %v1716
        %v1718 = vpop.f32.mrb[0].mxu0
        %v1719 = vpop.f32.mrb[0].mxu0
        %v1720 = vadd.f32 %v1665, %v1719
        %v1721 = vpop.f32.mrb[0].mxu0
        %1722 = vdwg.mxu0
        %v1723 = vmax.f32 %v1717, 0.0
        %v1724 = vmax.f32 %v1720, 0.0
        %v1725 = vpack.c.bf16 %v1724, %v1723
        %v1726 = vld [vmem:[%s670] sm:$0xf]
        %v1727 = vld [vmem:[%s670 + $0x4] sm:$0xf]
        %v1728 = vld [vmem:[%s670 + $0x8] sm:$0xf]
        %v1729 = vld [vmem:[%s670 + $0xc] sm:$0xf]
        %v1730 = vld [vmem:[%s670 + $0x10] sm:$0xf]
        %v1731 = vld [vmem:[%s670 + $0x14] sm:$0xf]
        %v1732 = vld [vmem:[%s670 + $0x18] sm:$0xf]
        %v1733 = vld [vmem:[%s670 + $0x1c] sm:$0xf]
        %v1734 = vld [vmem:[%s673] sm:$0x1]
        %v1736 = vlaneseq
        %v1737 = vshrl.u32 %v1736, 7
        %v1738 = vsub.s32 0, %v1737
        %v1739 = vrot.slane %v1734, %v1738
        %v1749 = vunpack.c.l.b16 %v1726
        %v1750 = vunpack.c.l.b16 %v1727
        %v1751 = vunpack.c.l.b16 %v1728
        %v1752 = vunpack.c.l.b16 %v1729
        %v1753 = vunpack.c.l.b16 %v1730
        %v1754 = vunpack.c.l.b16 %v1731
        %v1755 = vunpack.c.l.b16 %v1732
        %v1756 = vunpack.c.l.b16 %v1733
        %v1757 = vpack.c.b16 %v1750, %v1749
        %v1758 = vpack.c.b16 %v1752, %v1751
        %v1759 = vpack.c.b16 %v1754, %v1753
        %v1760 = vpack.c.b16 %v1756, %v1755
        %vm1765 = vcmask 523264
        %v1767 = vsel %vm1765, %v1725, 0
        %1769 = vmatprep.subr.bf16.mxu0 0
        %1770 = vmatpush1.bf16.msra.mxu0 %v1757
        %1771 = vmatprep.subr.bf16.mxu0 0
        %1772 = vmatpush1.bf16.msra.mxu0 %v1758
        %1773 = vmatprep.subr.bf16.mxu0 0
        %1774 = vmatpush1.bf16.msra.mxu0 %v1759
        %1775 = vmatprep.subr.bf16.mxu0 0
        %1776 = vmatpush1.bf16.msra.mxu0 %v1760
        %1777 = vmatprep.subr.bf16.mxu0 0
        %1778 = vmatpush1.bf16.msra.mxu0 0
        %1779 = vmatprep.subr.bf16.mxu0 0
        %1780 = vmatpush1.bf16.msra.mxu0 0
        %1781 = vmatprep.subr.bf16.mxu0 0
        %1782 = vmatpush1.bf16.msra.mxu0 0
        %1783 = vmatprep.subr.bf16.mxu0 0
        %1784 = vmatpush1.bf16.msra.mxu0 0
        %1785 = vmatprep.subr.bf16.mxu0 0
        %1786 = vmatpush1.bf16.msra.mxu0 0
        %1787 = vmatprep.subr.bf16.mxu0 0
        %1788 = vmatpush1.bf16.msra.mxu0 0
        %1789 = vmatprep.subr.bf16.mxu0 0
        %1790 = vmatpush1.bf16.msra.mxu0 0
        %1791 = vmatprep.subr.bf16.mxu0 0
        %1792 = vmatpush1.bf16.msra.mxu0 0
        %1793 = vmatprep.subr.bf16.mxu0 0
        %1794 = vmatpush1.bf16.msra.mxu0 0
        %1795 = vmatprep.subr.bf16.mxu0 0
        %1796 = vmatpush1.bf16.msra.mxu0 0
        %1797 = vmatprep.subr.bf16.mxu0 0
        %1798 = vmatpush1.bf16.msra.mxu0 0
        %1799 = vmatprep.subr.bf16.mxu0 0
        %1800 = vmatpush1.bf16.msra.mxu0 0
        %1801 = vmatprep.mubr.bf16.mxu0 0
        %1802 = vmatmul.mubr.bf16.gmra.mrb[0].mxu0 %v1767
        %v1803 = vpop.f32.mrb[0].mxu0
        %v1804 = vadd.f32 %v1739, %v1803
        %v1805 = vpop.f32.mrb[0].mxu0
        %v1806 = vpop.f32.mrb[0].mxu0
        %v1807 = vadd.f32 %v1739, %v1806
        %v1808 = vpop.f32.mrb[0].mxu0
        %1809 = vdwg.mxu0
        %v1810 = vadd.f32 %v1804, %v1653
        %v1811 = vadd.f32 %v1807, %v1654
        %v1812 = vld [vmem:[%s676] sm:$0x1]
        %v1813 = vld [vmem:[%s679] sm:$0x1]
        %v1814 = vsel %vm788, %v1810, 0.0
        %1815 = vadd.xlane.f32.xlu0 %v1814
        %v1816 = vpop.xlane.xlu0 %1815
        %v1817 = vsel %vm788, %v1811, 0.0
        %1818 = vadd.xlane.f32.xlu0 %v1817
        %v1819 = vpop.xlane.xlu0 %1818
        %v1820 = vmul.f32 %v1816, %v1614
        %v1821 = vmul.f32 %v1819, %v1614
        %v1822 = vmul.f32 %v1810, %v1810
        %v1823 = vmul.f32 %v1811, %v1811
        %v1824 = vsel %vm788, %v1822, 0.0
        %1825 = vadd.xlane.f32.xlu0 %v1824
        %v1826 = vpop.xlane.xlu0 %1825
        %v1827 = vsel %vm788, %v1823, 0.0
        %1828 = vadd.xlane.f32.xlu0 %v1827
        %v1829 = vpop.xlane.xlu0 %1828
        %v1830 = vmul.f32 %v1826, %v1614
        %v1831 = vmul.f32 %v1829, %v1614
        %v1832 = vmul.f32 %v1820, %v1820
        %v1833 = vmul.f32 %v1821, %v1821
        %v1834 = vsub.f32 %v1830, %v1832
        %v1835 = vsub.f32 %v1831, %v1833
        %v1836 = vsub.f32 %v1810, %v1820
        %v1837 = vsub.f32 %v1811, %v1821
        %v1838 = vadd.f32 %v1834, 1e-05
        %v1839 = vadd.f32 %v1835, 1e-05
        %v1840 = vrsqrt.pop %v1838
        %v1841 = vrsqrt.pop %v1839
        %v1842 = vmul.f32 %v1836, %v1840
        %v1843 = vmul.f32 %v1837, %v1841
        %v1845 = vlaneseq
        %v1846 = vshrl.u32 %v1845, 7
        %v1847 = vsub.s32 0, %v1846
        %v1848 = vrot.slane %v1812, %v1847
        %v1850 = vmul.f32 %v1842, %v1848
        %v1851 = vmul.f32 %v1843, %v1848
        %v1853 = vlaneseq
        %v1854 = vshrl.u32 %v1853, 7
        %v1855 = vsub.s32 0, %v1854
        %v1856 = vrot.slane %v1813, %v1855
        %v1858 = vadd.f32 %v1850, %v1856
        %v1859 = vadd.f32 %v1851, %v1856
        %1860 = vst.msk [vmem:[#allocation2] sm:$0xff] %vm788, %v1858
        %1861 = vst.msk [vmem:[#allocation2 + $0x8] sm:$0xff] %vm788, %v1859
        %p1862 = scmp.eq.s32.totalorder %s28, 1
        // Predicated region
        $region89: #{_lambda_.1} parent=83 // pred_check
          %p1863 = pneg %p1862
        $region90: #{_lambda_.1} parent=83 // pred_check_branch
          %1865 = sbr.rel (%p1863) target = $region92
        $region91: #{_lambda_.1} parent=83 // pred_region
          %1866 = vst.msk [vmem:[#allocation3] sm:$0xff] %vm788, %v1858
          %1867 = vst.msk [vmem:[#allocation3 + $0x8] sm:$0xff] %vm788, %v1859
        $region92: #{_lambda_.1} parent=83 // pred_fallthru
          _
        // Predicated region
        $region93: #{_lambda_.1} parent=83 // pred_check
          %p1868 = pneg %p437
        $region94: #{_lambda_.1} parent=83 // pred_check_branch
          %1870 = sbr.rel (%p1868) target = $region96
        $region95: #{_lambda_.1} parent=83 // pred_region
          %s1872 = ssub.s32 256, 256
          %1873 = vsyncadd [#allocation4], %s1872
          %s1874 = sshll.u32 [#allocation3], 4
          %s1875 = int_to_ptr.vmem [resolvable:$true] %s1874
          %1880 = dma.vmem_to_hbm [thread:$0]  %s1875, 256, %s16, [#allocation4], 128, 128, 8
        $region96: #{_lambda_.1} parent=83 // pred_fallthru
          _
        // Predicated region
        $region97: #{_lambda_.1} parent=83 // pred_check
          %p1881 = pneg %p437
        $region98: #{_lambda_.1} parent=83 // pred_check_branch
          %1883 = sbr.rel (%p1881) target = $region100
        $region99: #{_lambda_.1} parent=83 // pred_region
          %1884 = dma.done [#allocation4], 256
        $region100: #{_lambda_.1} parent=83 // pred_fallthru
          _
      $region84: #{_lambda_.1} parent=5 // pred_fallthru
        _
      %p1885 = scmp.le.s32.totalorder 2, %s23
      // Predicated region
      $region101: #{_lambda_.1} parent=5 // pred_check
        %p1886 = pneg %p1885
      $region102: #{_lambda_.1} parent=5 // pred_check_branch
        %1888 = sbr.rel (%p1886) target = $region104
      $region103: #{_lambda_.1} parent=5 // pred_region
        %s1889 = ssub.s32 %s23, 2
      $region104: #{_lambda_.1} parent=5 // pred_fallthru
        _
    $region6: #{_lambda_.1} parent=1 // loop_footer
      %s27 = sadd.s32 1, %s23
    $region7: #{_lambda_.1} parent=1 // loop_footer_branch
      %22 = sbr.rel target = $region3
    $region8: #{_lambda_.1} parent=1 // loop_exit
      _
    %1890 = vsyncpa [#allocation4], 1
    %s1891 = scalar_lea.sflag [#allocation4], 1
    %1892 = vsyncpa %s1891, 1

</llo_original>
